<compile_context>
chip_gen: v7x
topology: tpu7x:2x2x1
jax: 0.10.0
libtpu: 0.0.40
codegen_flags: <defaults>
</compile_context>

<pallas_src>
import jax
import jax.numpy as jnp
from jax.experimental import pallas as pl
from jax.experimental.pallas import tpu as pltpu

# ----------------------------- config ---------------------------------------
B = 2           # batch
N = 16          # number of points per cloud
INPUT_DIMS = 3  # per-point feature dim (x, y, z)
ZDIMS = 16      # latent size
EPS = 1e-5      # BatchNorm eps (PyTorch default)


# ----------------------------- kernel ---------------------------------------
def encoder_kernel(x_ref, w1_ref, w23_ref, w4h3_ref, wh12_ref, bias_ref, out_ref):
    # x_ref    : (3, B*N, 1)  f32   per-coordinate point columns
    # w1_ref   : (3, 1, 128)  bf16  folded conv1 rows
    # w23_ref  : (128, 384)   bf16  [conv2 (128,128) | conv3 (128,256)]
    # w4h3_ref : (256, 640)   bf16  [conv4 (256,512) | block-diag fc3_m/fc3_v padded (256,128)]
    # wh12_ref : (512, 768)   bf16  [fc1_m|fc1_v fused (512,512) | block-diag fc2_m/fc2_v (512,256)]
    # bias_ref : (1, 1920)    f32   all biases, 128-aligned segments
    # out_ref  : (B, 128)     f32   lanes 0:16 = m, 16:32 = v
    f32, bf16 = jnp.float32, jnp.bfloat16
    bn = x_ref.shape[1]       # B*N
    nb = out_ref.shape[0]     # B

    # static, 128-aligned slices of the packed bias slab -> each (1, C) f32
    b1 = bias_ref[:, 0:128]
    b2 = bias_ref[:, 128:256]
    b3 = bias_ref[:, 256:512]
    b4 = bias_ref[:, 512:1024]
    bh1 = bias_ref[:, 1024:1536]
    bh2 = bias_ref[:, 1536:1792]
    bh3 = bias_ref[:, 1792:1920]

    # conv1 (K=3): VPU broadcast-FMAs, keeps the MXU slot free.
    h = (x_ref[0] * w1_ref[0].astype(f32)
         + x_ref[1] * w1_ref[1].astype(f32)
         + x_ref[2] * w1_ref[2].astype(f32)) + b1              # (B*N, 128)
    h = jnp.maximum(h, 0.0)

    # conv2 / conv3 / conv4: bf16 MXU matmuls, f32 accumulation (BN folded).
    h = jnp.maximum(jnp.dot(h.astype(bf16), w23_ref[:, 0:128],
                            preferred_element_type=f32) + b2, 0.0)
    h = jnp.maximum(jnp.dot(h.astype(bf16), w23_ref[:, 128:384],
                            preferred_element_type=f32) + b3, 0.0)
    h = jnp.dot(h.astype(bf16), w4h3_ref[:, 0:512],
                preferred_element_type=f32) + b4                # (B*N, 512), no relu

    # global max-pool over points (torch.max(x, 2))
    g = jnp.max(h.reshape(nb, bn // nb, 512), axis=1)           # (B, 512)

    # fused mean/var heads: [fc1_m | fc1_v], block-diag fc2, block-diag fc3.
    mv = jnp.maximum(jnp.dot(g.astype(bf16), wh12_ref[:, 0:512],
                             preferred_element_type=f32) + bh1, 0.0)   # (B, 512)
    mv = jnp.maximum(jnp.dot(mv.astype(bf16), wh12_ref[:, 512:768],
                             preferred_element_type=f32) + bh2, 0.0)   # (B, 256)
    out = jnp.dot(mv.astype(bf16), w4h3_ref[:, 512:640],
                  preferred_element_type=f32) + bh3                    # (B, 128)

    out_ref[...] = out.astype(out_ref.dtype)


# ----------------------------- BN folding ------------------------------------
def fold_bn(W, b, gamma, beta, mean, var, eps=EPS):
    """Fold eval-mode BatchNorm into the preceding (out,in) weight + bias.
    Returns W transposed to (in, out) and bias (out,)."""
    scale = gamma / jnp.sqrt(var + eps)
    return (W * scale[:, None]).T, (b - mean) * scale + beta


def fold_plain(W, b):
    return W.T, b


def fold_all(p):
    layers = {}
    for name in ("conv1", "conv2", "conv3", "conv4",
                 "fc1_m", "fc2_m", "fc1_v", "fc2_v"):
        layers[name] = fold_bn(*p[name])
    layers["fc3_m"] = fold_plain(*p["fc3_m"])
    layers["fc3_v"] = fold_plain(*p["fc3_v"])
    return layers


# ----------------------------- packing ---------------------------------------
def pack_params(layers):
    bf16 = jnp.bfloat16
    w1, b1 = layers["conv1"]      # (3, 128)
    w2, b2 = layers["conv2"]      # (128, 128)
    w3, b3 = layers["conv3"]      # (128, 256)
    w4, b4 = layers["conv4"]      # (256, 512)
    wm1, bm1 = layers["fc1_m"]    # (512, 256)
    wm2, bm2 = layers["fc2_m"]    # (256, 128)
    wm3, bm3 = layers["fc3_m"]    # (128, 16)
    wv1, bv1 = layers["fc1_v"]
    wv2, bv2 = layers["fc2_v"]
    wv3, bv3 = layers["fc3_v"]

    # conv1 rows, one (1,128) slab per coordinate -> used as VPU broadcasts
    w1p3 = w1.astype(bf16)[:, None, :]                                   # (3, 1, 128)
    # conv2 | conv3
    w23 = jnp.concatenate([w2, w3], axis=1).astype(bf16)                 # (128, 384)
    # fused head fc1: [fc1_m | fc1_v]
    wh1 = jnp.concatenate([wm1, wv1], axis=1)                            # (512, 512)
    # block-diagonal head fc2
    wh2 = (jnp.zeros((512, 256), jnp.float32)
           .at[0:256, 0:128].set(wm2)
           .at[256:512, 128:256].set(wv2))
    wh12 = jnp.concatenate([wh1, wh2], axis=1).astype(bf16)              # (512, 768)
    # block-diagonal head fc3, padded to 128 output lanes
    wh3 = (jnp.zeros((256, 128), jnp.float32)
           .at[0:128, 0:ZDIMS].set(wm3)
           .at[128:256, ZDIMS:2 * ZDIMS].set(wv3))
    w4h3 = jnp.concatenate([w4, wh3], axis=1).astype(bf16)               # (256, 640)

    # all biases packed in one f32 slab, 128-aligned segments
    bh1 = jnp.concatenate([bm1, bv1])                                    # (512,)
    bh2 = jnp.concatenate([bm2, bv2])                                    # (256,)
    bh3 = (jnp.zeros((128,), jnp.float32)
           .at[0:ZDIMS].set(bm3)
           .at[ZDIMS:2 * ZDIMS].set(bv3))
    bias = jnp.concatenate([b1, b2, b3, b4, bh1, bh2, bh3])[None, :].astype(jnp.float32)  # (1, 1920)

    return w1p3, w23, w4h3, wh12, bias


# ----------------------------- wrapper ----------------------------------------
def encoder_forward(x, packed):
    """x: (B, N, INPUT_DIMS) float32 -> (m, v) each (B, ZDIMS)."""
    bsz, n, d = x.shape
    x2 = x.reshape(bsz * n, d).astype(jnp.float32)
    xc = jnp.transpose(x2)[:, :, None]                       # (3, B*N, 1), layout plumbing in XLA
    vmem = pl.BlockSpec(memory_space=pltpu.MemorySpace.VMEM)
    out = pl.pallas_call(
        encoder_kernel,
        out_shape=jax.ShapeDtypeStruct((bsz, 128), jnp.float32),
        in_specs=[vmem] * (1 + len(packed)),
        out_specs=vmem,
    )(xc, *packed)
    return out[:, 0:ZDIMS], out[:, ZDIMS:2 * ZDIMS]


# ----------------------------- params ----------------------------------------
def make_params():
    keys = iter(jax.random.split(jax.random.PRNGKey(0), 64))

    def lin(out_c, in_c):
        W = jax.random.normal(next(keys), (out_c, in_c), jnp.float32) * 0.1
        b = jax.random.normal(next(keys), (out_c,), jnp.float32) * 0.05
        return W, b

    def bn(c):
        gamma = 1.0 + 0.1 * jax.random.normal(next(keys), (c,), jnp.float32)
        beta = 0.05 * jax.random.normal(next(keys), (c,), jnp.float32)
        mean = 0.05 * jax.random.normal(next(keys), (c,), jnp.float32)
        var = 0.5 + jax.random.uniform(next(keys), (c,), jnp.float32)
        return gamma, beta, mean, var

    p = {}
    p["conv1"] = (*lin(128, INPUT_DIMS), *bn(128))
    p["conv2"] = (*lin(128, 128), *bn(128))
    p["conv3"] = (*lin(256, 128), *bn(256))
    p["conv4"] = (*lin(512, 256), *bn(512))
    p["fc1_m"] = (*lin(256, 512), *bn(256))
    p["fc2_m"] = (*lin(128, 256), *bn(128))
    p["fc3_m"] = lin(ZDIMS, 128)
    p["fc1_v"] = (*lin(256, 512), *bn(256))
    p["fc2_v"] = (*lin(128, 256), *bn(128))
    p["fc3_v"] = lin(ZDIMS, 128)
    return p


# ----------------------------- references (pure JAX) --------------------------
def reference_bf16(x, layers):
    """Per-layer (unfused, unpacked) reference with the same bf16 weight storage
    and f32 accumulation as the kernel. Validates packing + kernel math."""
    bf16, f32 = jnp.bfloat16, jnp.float32

    def mm(a, name):
        W, b = layers[name]
        return jnp.dot(a.astype(bf16), W.astype(bf16),
                       preferred_element_type=f32) + b

    bsz, n, d = x.shape
    x2 = x.reshape(bsz * n, d)
    w1, b1 = layers["conv1"]
    w1f = w1.astype(bf16).astype(f32)
    h = jnp.maximum(x2[:, 0:1] * w1f[0:1, :]
                    + x2[:, 1:2] * w1f[1:2, :]
                    + x2[:, 2:3] * w1f[2:3, :] + b1, 0.0)
    h = jnp.maximum(mm(h, "conv2"), 0.0)
    h = jnp.maximum(mm(h, "conv3"), 0.0)
    h = mm(h, "conv4")
    g = jnp.max(h.reshape(bsz, n, -1), axis=1)
    m = jnp.maximum(mm(g, "fc1_m"), 0.0)
    m = jnp.maximum(mm(m, "fc2_m"), 0.0)
    m = mm(m, "fc3_m")
    v = jnp.maximum(mm(g, "fc1_v"), 0.0)
    v = jnp.maximum(mm(v, "fc2_v"), 0.0)
    v = mm(v, "fc3_v")
    return m, v


def reference_f32(x, layers):
    """Full-f32 reference of the original (eval-mode) forward."""
    def mm(a, name):
        W, b = layers[name]
        return a @ W + b

    bsz, n, d = x.shape
    h = x.reshape(bsz * n, d)
    h = jnp.maximum(mm(h, "conv1"), 0.0)
    h = jnp.maximum(mm(h, "conv2"), 0.0)
    h = jnp.maximum(mm(h, "conv3"), 0.0)
    h = mm(h, "conv4")
    g = jnp.max(h.reshape(bsz, n, -1), axis=1)
    m = jnp.maximum(mm(g, "fc1_m"), 0.0)
    m = jnp.maximum(mm(m, "fc2_m"), 0.0)
    m = mm(m, "fc3_m")
    v = jnp.maximum(mm(g, "fc1_v"), 0.0)
    v = jnp.maximum(mm(v, "fc2_v"), 0.0)
    v = mm(v, "fc3_v")
    return m, v


# ----------------------------- main -------------------------------------------
if __name__ == "__main__":
    key = jax.random.PRNGKey(0)
    x = jax.random.normal(key, (B, N, INPUT_DIMS), jnp.float32)  # torch input: (B, N, input_dims)

    params = make_params()
    layers = fold_all(params)
    packed = pack_params(layers)

    m, v = encoder_forward(x, packed)
    m, v = jax.block_until_ready((m, v))
    assert m.shape == (B, ZDIMS) and v.shape == (B, ZDIMS)

    # exact-math check: same bf16 weight storage / f32 accumulation, but unfused,
    # unpacked per-layer path (validates parameter packing and kernel math)
    m_r, v_r = reference_bf16(x, layers)
    assert jnp.allclose(m, m_r, atol=2e-3, rtol=2e-3)
    assert jnp.allclose(v, v_r, atol=2e-3, rtol=2e-3)

    # loose check vs full-f32 math (only difference is bf16 weight storage)
    m_f, v_f = reference_f32(x, layers)
    assert jnp.allclose(m, m_f, atol=5e-2, rtol=5e-2)
    assert jnp.allclose(v, v_f, atol=5e-2, rtol=5e-2)

    print("KERNEL_OK")
</pallas_src>

<mosaic_0001>
module attributes {stable_mosaic.version = 11 : i64} {
  func.func @encoder_kernel(%arg0: memref<3x32x1xf32, #tpu.memory_space<vmem>>, %arg1: memref<3x1x128xbf16, #tpu.memory_space<vmem>>, %arg2: memref<128x384xbf16, #tpu.memory_space<vmem>>, %arg3: memref<256x640xbf16, #tpu.memory_space<vmem>>, %arg4: memref<512x768xbf16, #tpu.memory_space<vmem>>, %arg5: memref<1x1920xf32, #tpu.memory_space<vmem>>, %arg6: memref<2x128xf32, #tpu.memory_space<vmem>>) attributes {dimension_semantics = [], scalar_prefetch = 0 : i64, scratch_operands = 0 : i64, tpu.core_type = #tpu.core_type<tc>} {
    %c0 = arith.constant 0 : index
    %c0_0 = arith.constant 0 : index
    %0 = vector.load %arg5[%c0, %c0_0] : memref<1x1920xf32, #tpu.memory_space<vmem>>, vector<1x128xf32>
    %c0_1 = arith.constant 0 : index
    %c128 = arith.constant 128 : index
    %1 = vector.load %arg5[%c0_1, %c128] : memref<1x1920xf32, #tpu.memory_space<vmem>>, vector<1x128xf32>
    %c0_2 = arith.constant 0 : index
    %c256 = arith.constant 256 : index
    %2 = vector.load %arg5[%c0_2, %c256] : memref<1x1920xf32, #tpu.memory_space<vmem>>, vector<1x256xf32>
    %c0_3 = arith.constant 0 : index
    %c512 = arith.constant 512 : index
    %3 = vector.load %arg5[%c0_3, %c512] : memref<1x1920xf32, #tpu.memory_space<vmem>>, vector<1x512xf32>
    %c0_4 = arith.constant 0 : index
    %c1024 = arith.constant 1024 : index
    %4 = vector.load %arg5[%c0_4, %c1024] : memref<1x1920xf32, #tpu.memory_space<vmem>>, vector<1x512xf32>
    %c0_5 = arith.constant 0 : index
    %c1536 = arith.constant 1536 : index
    %5 = vector.load %arg5[%c0_5, %c1536] : memref<1x1920xf32, #tpu.memory_space<vmem>>, vector<1x256xf32>
    %c0_6 = arith.constant 0 : index
    %c1792 = arith.constant 1792 : index
    %6 = vector.load %arg5[%c0_6, %c1792] : memref<1x1920xf32, #tpu.memory_space<vmem>>, vector<1x128xf32>
    %c0_7 = arith.constant 0 : index
    %c0_8 = arith.constant 0 : index
    %c0_9 = arith.constant 0 : index
    %7 = vector.load %arg0[%c0_7, %c0_8, %c0_9] : memref<3x32x1xf32, #tpu.memory_space<vmem>>, vector<1x32x1xf32>
    %8 = vector.shape_cast %7 : vector<1x32x1xf32> to vector<32x1xf32>
    %c0_10 = arith.constant 0 : index
    %c0_11 = arith.constant 0 : index
    %c0_12 = arith.constant 0 : index
    %9 = vector.load %arg1[%c0_10, %c0_11, %c0_12] : memref<3x1x128xbf16, #tpu.memory_space<vmem>>, vector<1x1x128xbf16>
    %10 = vector.shape_cast %9 : vector<1x1x128xbf16> to vector<1x128xbf16>
    %11 = arith.extf %10 : vector<1x128xbf16> to vector<1x128xf32>
    %12 = vector.broadcast %8 : vector<32x1xf32> to vector<32x128xf32>
    %13 = vector.broadcast %11 : vector<1x128xf32> to vector<32x128xf32>
    %14 = arith.mulf %12, %13 : vector<32x128xf32>
    %c1 = arith.constant 1 : index
    %c0_13 = arith.constant 0 : index
    %c0_14 = arith.constant 0 : index
    %15 = vector.load %arg0[%c1, %c0_13, %c0_14] : memref<3x32x1xf32, #tpu.memory_space<vmem>>, vector<1x32x1xf32>
    %16 = vector.shape_cast %15 : vector<1x32x1xf32> to vector<32x1xf32>
    %c1_15 = arith.constant 1 : index
    %c0_16 = arith.constant 0 : index
    %c0_17 = arith.constant 0 : index
    %17 = vector.load %arg1[%c1_15, %c0_16, %c0_17] : memref<3x1x128xbf16, #tpu.memory_space<vmem>>, vector<1x1x128xbf16>
    %18 = vector.shape_cast %17 : vector<1x1x128xbf16> to vector<1x128xbf16>
    %19 = arith.extf %18 : vector<1x128xbf16> to vector<1x128xf32>
    %20 = vector.broadcast %16 : vector<32x1xf32> to vector<32x128xf32>
    %21 = vector.broadcast %19 : vector<1x128xf32> to vector<32x128xf32>
    %22 = arith.mulf %20, %21 : vector<32x128xf32>
    %23 = arith.addf %14, %22 : vector<32x128xf32>
    %c2 = arith.constant 2 : index
    %c0_18 = arith.constant 0 : index
    %c0_19 = arith.constant 0 : index
    %24 = vector.load %arg0[%c2, %c0_18, %c0_19] : memref<3x32x1xf32, #tpu.memory_space<vmem>>, vector<1x32x1xf32>
    %25 = vector.shape_cast %24 : vector<1x32x1xf32> to vector<32x1xf32>
    %c2_20 = arith.constant 2 : index
    %c0_21 = arith.constant 0 : index
    %c0_22 = arith.constant 0 : index
    %26 = vector.load %arg1[%c2_20, %c0_21, %c0_22] : memref<3x1x128xbf16, #tpu.memory_space<vmem>>, vector<1x1x128xbf16>
    %27 = vector.shape_cast %26 : vector<1x1x128xbf16> to vector<1x128xbf16>
    %28 = arith.extf %27 : vector<1x128xbf16> to vector<1x128xf32>
    %29 = vector.broadcast %25 : vector<32x1xf32> to vector<32x128xf32>
    %30 = vector.broadcast %28 : vector<1x128xf32> to vector<32x128xf32>
    %31 = arith.mulf %29, %30 : vector<32x128xf32>
    %32 = arith.addf %23, %31 : vector<32x128xf32>
    %33 = vector.broadcast %0 : vector<1x128xf32> to vector<32x128xf32>
    %34 = arith.addf %32, %33 : vector<32x128xf32>
    %cst = arith.constant 0.000000e+00 : f32
    %35 = vector.broadcast %cst : f32 to vector<32x128xf32>
    %36 = arith.maximumf %34, %35 : vector<32x128xf32>
    %37 = arith.truncf %36 : vector<32x128xf32> to vector<32x128xbf16>
    %c0_23 = arith.constant 0 : index
    %c0_24 = arith.constant 0 : index
    %38 = vector.load %arg2[%c0_23, %c0_24] : memref<128x384xbf16, #tpu.memory_space<vmem>>, vector<128x128xbf16>
    %cst_25 = arith.constant dense<0.000000e+00> : vector<32x128xf32>
    %39 = tpu.matmul %37, %38, %cst_25 {dimension_numbers = #tpu.dot_dimension_numbers<[1], [0], [0], [1], [0, 0, 1, 1], [], []>} : vector<32x128xbf16>, vector<128x128xbf16>, vector<32x128xf32> -> vector<32x128xf32>
    %40 = vector.broadcast %1 : vector<1x128xf32> to vector<32x128xf32>
    %41 = arith.addf %39, %40 : vector<32x128xf32>
    %cst_26 = arith.constant 0.000000e+00 : f32
    %42 = vector.broadcast %cst_26 : f32 to vector<32x128xf32>
    %43 = arith.maximumf %41, %42 : vector<32x128xf32>
    %44 = arith.truncf %43 : vector<32x128xf32> to vector<32x128xbf16>
    %c0_27 = arith.constant 0 : index
    %c128_28 = arith.constant 128 : index
    %45 = vector.load %arg2[%c0_27, %c128_28] : memref<128x384xbf16, #tpu.memory_space<vmem>>, vector<128x256xbf16>
    %cst_29 = arith.constant dense<0.000000e+00> : vector<32x256xf32>
    %46 = tpu.matmul %44, %45, %cst_29 {dimension_numbers = #tpu.dot_dimension_numbers<[1], [0], [0], [1], [0, 0, 1, 1], [], []>} : vector<32x128xbf16>, vector<128x256xbf16>, vector<32x256xf32> -> vector<32x256xf32>
    %47 = vector.broadcast %2 : vector<1x256xf32> to vector<32x256xf32>
    %48 = arith.addf %46, %47 : vector<32x256xf32>
    %cst_30 = arith.constant 0.000000e+00 : f32
    %49 = vector.broadcast %cst_30 : f32 to vector<32x256xf32>
    %50 = arith.maximumf %48, %49 : vector<32x256xf32>
    %51 = arith.truncf %50 : vector<32x256xf32> to vector<32x256xbf16>
    %c0_31 = arith.constant 0 : index
    %c0_32 = arith.constant 0 : index
    %52 = vector.load %arg3[%c0_31, %c0_32] : memref<256x640xbf16, #tpu.memory_space<vmem>>, vector<256x512xbf16>
    %cst_33 = arith.constant dense<0.000000e+00> : vector<32x512xf32>
    %53 = tpu.matmul %51, %52, %cst_33 {dimension_numbers = #tpu.dot_dimension_numbers<[1], [0], [0], [1], [0, 0, 1, 1], [], []>} : vector<32x256xbf16>, vector<256x512xbf16>, vector<32x512xf32> -> vector<32x512xf32>
    %54 = vector.broadcast %3 : vector<1x512xf32> to vector<32x512xf32>
    %55 = arith.addf %53, %54 : vector<32x512xf32>
    %56 = vector.shape_cast %55 : vector<32x512xf32> to vector<2x16x512xf32>
    %cst_34 = arith.constant dense<0xFF800000> : vector<2x512xf32>
    %57 = vector.multi_reduction <maximumf>, %56, %cst_34 [1] : vector<2x16x512xf32> to vector<2x512xf32>
    %58 = arith.truncf %57 : vector<2x512xf32> to vector<2x512xbf16>
    %c0_35 = arith.constant 0 : index
    %c0_36 = arith.constant 0 : index
    %59 = vector.load %arg4[%c0_35, %c0_36] : memref<512x768xbf16, #tpu.memory_space<vmem>>, vector<512x512xbf16>
    %cst_37 = arith.constant dense<0.000000e+00> : vector<2x512xf32>
    %60 = tpu.matmul %58, %59, %cst_37 {dimension_numbers = #tpu.dot_dimension_numbers<[1], [0], [0], [1], [0, 0, 1, 1], [], []>} : vector<2x512xbf16>, vector<512x512xbf16>, vector<2x512xf32> -> vector<2x512xf32>
    %61 = vector.broadcast %4 : vector<1x512xf32> to vector<2x512xf32>
    %62 = arith.addf %60, %61 : vector<2x512xf32>
    %cst_38 = arith.constant 0.000000e+00 : f32
    %63 = vector.broadcast %cst_38 : f32 to vector<2x512xf32>
    %64 = arith.maximumf %62, %63 : vector<2x512xf32>
    %65 = arith.truncf %64 : vector<2x512xf32> to vector<2x512xbf16>
    %c0_39 = arith.constant 0 : index
    %c512_40 = arith.constant 512 : index
    %66 = vector.load %arg4[%c0_39, %c512_40] : memref<512x768xbf16, #tpu.memory_space<vmem>>, vector<512x256xbf16>
    %cst_41 = arith.constant dense<0.000000e+00> : vector<2x256xf32>
    %67 = tpu.matmul %65, %66, %cst_41 {dimension_numbers = #tpu.dot_dimension_numbers<[1], [0], [0], [1], [0, 0, 1, 1], [], []>} : vector<2x512xbf16>, vector<512x256xbf16>, vector<2x256xf32> -> vector<2x256xf32>
    %68 = vector.broadcast %5 : vector<1x256xf32> to vector<2x256xf32>
    %69 = arith.addf %67, %68 : vector<2x256xf32>
    %cst_42 = arith.constant 0.000000e+00 : f32
    %70 = vector.broadcast %cst_42 : f32 to vector<2x256xf32>
    %71 = arith.maximumf %69, %70 : vector<2x256xf32>
    %72 = arith.truncf %71 : vector<2x256xf32> to vector<2x256xbf16>
    %c0_43 = arith.constant 0 : index
    %c512_44 = arith.constant 512 : index
    %73 = vector.load %arg3[%c0_43, %c512_44] : memref<256x640xbf16, #tpu.memory_space<vmem>>, vector<256x128xbf16>
    %cst_45 = arith.constant dense<0.000000e+00> : vector<2x128xf32>
    %74 = tpu.matmul %72, %73, %cst_45 {dimension_numbers = #tpu.dot_dimension_numbers<[1], [0], [0], [1], [0, 0, 1, 1], [], []>} : vector<2x256xbf16>, vector<256x128xbf16>, vector<2x128xf32> -> vector<2x128xf32>
    %75 = vector.broadcast %6 : vector<1x128xf32> to vector<2x128xf32>
    %76 = arith.addf %74, %75 : vector<2x128xf32>
    %c0_46 = arith.constant 0 : index
    %c0_47 = arith.constant 0 : index
    %77 = vector.load %arg6[%c0_46, %c0_47] : memref<2x128xf32, #tpu.memory_space<vmem>>, vector<2x128xf32>
    tpu.vector_store %arg6[%c0_46, %c0_47], %76 {strides = array<i32>} : memref<2x128xf32, #tpu.memory_space<vmem>>, vector<2x128xf32>,
    return
  }
}

</mosaic_0001>

<llo_original>
// kernel: tpu_custom_call.1
$region0: #{tpu_custom_call.1}
  #allocation0 [shape = 'u32[]', space=smem, size = 0x4, offset = 0x4, fixed_abs, tag = 'smem constant byte address 0x4 - core index']
  #allocation1 [shape = 'u32[144,128]{1,0:T(1,128)}', space=vmem, size = 0x12000, scoped, tag = 'internal scratch']
  %s0 = inlined_call_operand.vmem [shape: f32[3,32,1], index: 0, kind: input, shape index: {}]
  %s1 = inlined_call_operand.vmem [shape: bf16[3,1,128], index: 1, kind: input, shape index: {}]
  %s2 = inlined_call_operand.hbm [shape: bf16[128,384], index: 2, kind: input, shape index: {}]
  %s3 = inlined_call_operand.hbm [shape: bf16[256,640], index: 3, kind: input, shape index: {}]
  %s4 = inlined_call_operand.hbm [shape: bf16[512,768], index: 4, kind: input, shape index: {}]
  %s5 = inlined_call_operand.vmem [shape: f32[1,1920], index: 5, kind: input, shape index: {}]
  %s6 = inlined_call_operand.hbm [shape: f32[2,128], index: 6, kind: output, shape index: {}]
  %s7 = sld [smem:[#allocation0]]
  $region46: #{tpu_custom_call.1} parent=0
    _
  %s9 = ssub.s32 1, %s7
  %s10 = scalar_select 0, %s9, %s7
  $region1: #{tpu_custom_call.1} parent=0
    #allocation2 [shape = 'u8[98304]{0}', space=vmem, size = 0x18000, scoped, tag = 'input window, operand 2, single buffered']
    #allocation3 [shape = 's32[1]{0}', space=sflag, size = 0x4, scoped, tag = 'scoped memory for tpu_custom_call.1']
    #allocation4 [shape = 's32[1]{0}', space=sflag, size = 0x4, scoped, tag = 'scoped memory for tpu_custom_call.1']
    #allocation5 [shape = 'u8[327680]{0}', space=vmem, size = 0x50000, scoped, tag = 'input window, operand 3, single buffered']
    #allocation6 [shape = 's32[1]{0}', space=sflag, size = 0x4, scoped, tag = 'scoped memory for tpu_custom_call.1']
    #allocation7 [shape = 'u8[786432]{0}', space=vmem, size = 0xc0000, scoped, tag = 'input window, operand 4, single buffered']
    #allocation8 [shape = 'u8[1024]{0}', space=vmem, size = 0x400, scoped, tag = 'output window, operand 0, single buffered']
    %11 = vsyncpa [#allocation3], 0
    %12 = vsyncpa [#allocation6], 0
    %13 = vsyncpa [#allocation4], 0
    // Predicated region
    $region2: #{tpu_custom_call.1} parent=1 // pred_check
      _
    $region3: #{tpu_custom_call.1} parent=1 // pred_check_branch
      %15 = sbr.rel (0) target = $region5
    $region4: #{tpu_custom_call.1} parent=1 // pred_region
      _
    $region5: #{tpu_custom_call.1} parent=1 // pred_fallthru
      _
    // Predicated region
    $region6: #{tpu_custom_call.1} parent=1 // pred_check
      _
    $region7: #{tpu_custom_call.1} parent=1 // pred_check_branch
      %17 = sbr.rel (0) target = $region9
    $region8: #{tpu_custom_call.1} parent=1 // pred_region
      _
    $region9: #{tpu_custom_call.1} parent=1 // pred_fallthru
      _
    // Predicated region
    $region10: #{tpu_custom_call.1} parent=1 // pred_check
      _
    $region11: #{tpu_custom_call.1} parent=1 // pred_check_branch
      %19 = sbr.rel (0) target = $region13
    $region12: #{tpu_custom_call.1} parent=1 // pred_region
      %s21 = ssub.s32 3072, 3072
      %22 = vsyncadd [#allocation3], %s21
      %s23 = sshll.u32 [#allocation2], 4
      %s24 = int_to_ptr.vmem [resolvable:$true] %s23
      %29 = dma.hbm_to_vmem [thread:$0]  %s2, 3072, %s24, [#allocation3], 192, 192, 12
    $region13: #{tpu_custom_call.1} parent=1 // pred_fallthru
      _
    // Predicated region
    $region14: #{tpu_custom_call.1} parent=1 // pred_check
      _
    $region15: #{tpu_custom_call.1} parent=1 // pred_check_branch
      %31 = sbr.rel (0) target = $region17
    $region16: #{tpu_custom_call.1} parent=1 // pred_region
      %s33 = ssub.s32 10240, 10240
      %34 = vsyncadd [#allocation6], %s33
      %s35 = sshll.u32 [#allocation5], 4
      %s36 = int_to_ptr.vmem [resolvable:$true] %s35
      %41 = dma.hbm_to_vmem [thread:$0]  %s3, 10240, %s36, [#allocation6], 320, 320, 20
    $region17: #{tpu_custom_call.1} parent=1 // pred_fallthru
      _
    // Predicated region
    $region18: #{tpu_custom_call.1} parent=1 // pred_check
      _
    $region19: #{tpu_custom_call.1} parent=1 // pred_check_branch
      %43 = sbr.rel (0) target = $region21
    $region20: #{tpu_custom_call.1} parent=1 // pred_region
      %s45 = ssub.s32 24576, 24576
      %46 = vsyncadd [#allocation6], %s45
      %s47 = sshll.u32 [#allocation7], 4
      %s48 = int_to_ptr.vmem [resolvable:$true] %s47
      %53 = dma.hbm_to_vmem [thread:$0]  %s4, 24576, %s48, [#allocation6], 384, 384, 24
    $region21: #{tpu_custom_call.1} parent=1 // pred_fallthru
      _
    // Predicated region
    $region22: #{tpu_custom_call.1} parent=1 // pred_check
      _
    $region23: #{tpu_custom_call.1} parent=1 // pred_check_branch
      %55 = sbr.rel (0) target = $region25
    $region24: #{tpu_custom_call.1} parent=1 // pred_region
      _
    $region25: #{tpu_custom_call.1} parent=1 // pred_fallthru
      _
    // Predicated region
    $region26: #{tpu_custom_call.1} parent=1 // pred_check
      _
    $region27: #{tpu_custom_call.1} parent=1 // pred_check_branch
      %57 = sbr.rel (0) target = $region29
    $region28: #{tpu_custom_call.1} parent=1 // pred_region
      %58 = dma.done [#allocation3], 3072
    $region29: #{tpu_custom_call.1} parent=1 // pred_fallthru
      _
    // Predicated region
    $region30: #{tpu_custom_call.1} parent=1 // pred_check
      _
    $region31: #{tpu_custom_call.1} parent=1 // pred_check_branch
      %60 = sbr.rel (0) target = $region33
    $region32: #{tpu_custom_call.1} parent=1 // pred_region
      %61 = dma.done [#allocation6], 10240
    $region33: #{tpu_custom_call.1} parent=1 // pred_fallthru
      _
    // Predicated region
    $region34: #{tpu_custom_call.1} parent=1 // pred_check
      _
    $region35: #{tpu_custom_call.1} parent=1 // pred_check_branch
      %63 = sbr.rel (0) target = $region37
    $region36: #{tpu_custom_call.1} parent=1 // pred_region
      %64 = dma.done [#allocation6], 24576
    $region37: #{tpu_custom_call.1} parent=1 // pred_fallthru
      _
    %v66 = vld [vmem:[%s5] sm:$0x1]
    %v67 = vld [vmem:[%s5 + $0x1] sm:$0x1]
    %v68 = vld [vmem:[%s5 + $0x2] sm:$0x3]
    %v69 = vld [vmem:[%s5 + $0x4] sm:$0xf]
    %v70 = vld [vmem:[%s5 + $0x8] sm:$0xf]
    %v71 = vld [vmem:[%s5 + $0xc] sm:$0x3]
    %v72 = vld [vmem:[%s5 + $0xe] sm:$0x1]
    %v73 = vld [vmem:[%s0] sm:$0xff]
    %v74 = vld [vmem:[%s0 + $0x8] sm:$0xff]
    %v75 = vld [vmem:[%s0 + $0x10] sm:$0xff]
    %v76 = vld [vmem:[%s0 + $0x18] sm:$0xff]
    %v77 = vld [vmem:[%s1] sm:$0x1]
    %v78 = vunpack.c.l.bf16 %v77
    %80 = vset.pattern.permute.xlu0 0
    %81 = vperm.xlu0 %80, %v73
    %v82 = vpop.permute.xlu0 %81
    %85 = vset.pattern.permute.xlu0 0
    %86 = vperm.xlu0 %85, %v74
    %v87 = vpop.permute.xlu0 %86
    %90 = vset.pattern.permute.xlu0 0
    %91 = vperm.xlu0 %90, %v75
    %v92 = vpop.permute.xlu0 %91
    %95 = vset.pattern.permute.xlu0 0
    %96 = vperm.xlu0 %95, %v76
    %v97 = vpop.permute.xlu0 %96
    %v99 = vlaneseq
    %v100 = vshrl.u32 %v99, 7
    %v101 = vsub.s32 0, %v100
    %v102 = vrot.slane %v78, %v101
    %v103 = vmul.f32 %v82, %v102
    %v104 = vmul.f32 %v87, %v102
    %v105 = vmul.f32 %v92, %v102
    %v106 = vmul.f32 %v97, %v102
    %s107 = scalar_lea.vmem %s0, 32
    %v108 = vld [vmem:[%s107] sm:$0xff]
    %v109 = vld [vmem:[%s107 + $0x8] sm:$0xff]
    %v110 = vld [vmem:[%s107 + $0x10] sm:$0xff]
    %v111 = vld [vmem:[%s107 + $0x18] sm:$0xff]
    %s112 = scalar_lea.vmem %s1, 1
    %v113 = vld [vmem:[%s112] sm:$0x1]
    %v114 = vunpack.c.l.bf16 %v113
    %116 = vset.pattern.permute.xlu0 0
    %117 = vperm.xlu0 %116, %v108
    %v118 = vpop.permute.xlu0 %117
    %121 = vset.pattern.permute.xlu0 0
    %122 = vperm.xlu0 %121, %v109
    %v123 = vpop.permute.xlu0 %122
    %126 = vset.pattern.permute.xlu0 0
    %127 = vperm.xlu0 %126, %v110
    %v128 = vpop.permute.xlu0 %127
    %131 = vset.pattern.permute.xlu0 0
    %132 = vperm.xlu0 %131, %v111
    %v133 = vpop.permute.xlu0 %132
    %v135 = vlaneseq
    %v136 = vshrl.u32 %v135, 7
    %v137 = vsub.s32 0, %v136
    %v138 = vrot.slane %v114, %v137
    %v139 = vmul.f32 %v118, %v138
    %v140 = vmul.f32 %v123, %v138
    %v141 = vmul.f32 %v128, %v138
    %v142 = vmul.f32 %v133, %v138
    %v143 = vadd.f32 %v103, %v139
    %v144 = vadd.f32 %v104, %v140
    %v145 = vadd.f32 %v105, %v141
    %v146 = vadd.f32 %v106, %v142
    %s147 = scalar_lea.vmem %s0, 64
    %v148 = vld [vmem:[%s147] sm:$0xff]
    %v149 = vld [vmem:[%s147 + $0x8] sm:$0xff]
    %v150 = vld [vmem:[%s147 + $0x10] sm:$0xff]
    %v151 = vld [vmem:[%s147 + $0x18] sm:$0xff]
    %s152 = scalar_lea.vmem %s1, 2
    %v153 = vld [vmem:[%s152] sm:$0x1]
    %v154 = vunpack.c.l.bf16 %v153
    %156 = vset.pattern.permute.xlu0 0
    %157 = vperm.xlu0 %156, %v148
    %v158 = vpop.permute.xlu0 %157
    %161 = vset.pattern.permute.xlu0 0
    %162 = vperm.xlu0 %161, %v149
    %v163 = vpop.permute.xlu0 %162
    %166 = vset.pattern.permute.xlu0 0
    %167 = vperm.xlu0 %166, %v150
    %v168 = vpop.permute.xlu0 %167
    %171 = vset.pattern.permute.xlu0 0
    %172 = vperm.xlu0 %171, %v151
    %v173 = vpop.permute.xlu0 %172
    %v175 = vlaneseq
    %v176 = vshrl.u32 %v175, 7
    %v177 = vsub.s32 0, %v176
    %v178 = vrot.slane %v154, %v177
    %v179 = vmul.f32 %v158, %v178
    %v180 = vmul.f32 %v163, %v178
    %v181 = vmul.f32 %v168, %v178
    %v182 = vmul.f32 %v173, %v178
    %v183 = vadd.f32 %v143, %v179
    %v184 = vadd.f32 %v144, %v180
    %v185 = vadd.f32 %v145, %v181
    %v186 = vadd.f32 %v146, %v182
    %v188 = vlaneseq
    %v189 = vshrl.u32 %v188, 7
    %v190 = vsub.s32 0, %v189
    %v191 = vrot.slane %v66, %v190
    %v193 = vadd.f32 %v183, %v191
    %v194 = vadd.f32 %v184, %v191
    %v195 = vadd.f32 %v185, %v191
    %v196 = vadd.f32 %v186, %v191
    %v197 = vmax.f32 %v193, 0.0
    %v198 = vmax.f32 %v194, 0.0
    %v199 = vmax.f32 %v195, 0.0
    %v200 = vmax.f32 %v196, 0.0
    %v201 = vpack.c.bf16 %v198, %v197
    %v202 = vpack.c.bf16 %v200, %v199
    %v203 = vld [vmem:[#allocation2] sm:$0xf]
    %v204 = vld [vmem:[#allocation2 + $0xc] sm:$0xf]
    %v205 = vld [vmem:[#allocation2 + $0x18] sm:$0xf]
    %v206 = vld [vmem:[#allocation2 + $0x24] sm:$0xf]
    %v207 = vld [vmem:[#allocation2 + $0x30] sm:$0xf]
    %v208 = vld [vmem:[#allocation2 + $0x3c] sm:$0xf]
    %v209 = vld [vmem:[#allocation2 + $0x48] sm:$0xf]
    %v210 = vld [vmem:[#allocation2 + $0x54] sm:$0xf]
    %v211 = vld [vmem:[#allocation2 + $0x60] sm:$0xf]
    %v212 = vld [vmem:[#allocation2 + $0x6c] sm:$0xf]
    %v213 = vld [vmem:[#allocation2 + $0x78] sm:$0xf]
    %v214 = vld [vmem:[#allocation2 + $0x84] sm:$0xf]
    %v215 = vld [vmem:[#allocation2 + $0x90] sm:$0xf]
    %v216 = vld [vmem:[#allocation2 + $0x9c] sm:$0xf]
    %v217 = vld [vmem:[#allocation2 + $0xa8] sm:$0xf]
    %v218 = vld [vmem:[#allocation2 + $0xb4] sm:$0xf]
    %v220 = vlaneseq
    %v221 = vshrl.u32 %v220, 7
    %v222 = vsub.s32 0, %v221
    %v223 = vrot.slane %v67, %v222
    %v241 = vunpack.c.l.b16 %v203
    %v242 = vunpack.c.l.b16 %v204
    %v243 = vunpack.c.l.b16 %v205
    %v244 = vunpack.c.l.b16 %v206
    %v245 = vunpack.c.l.b16 %v207
    %v246 = vunpack.c.l.b16 %v208
    %v247 = vunpack.c.l.b16 %v209
    %v248 = vunpack.c.l.b16 %v210
    %v249 = vunpack.c.l.b16 %v211
    %v250 = vunpack.c.l.b16 %v212
    %v251 = vunpack.c.l.b16 %v213
    %v252 = vunpack.c.l.b16 %v214
    %v253 = vunpack.c.l.b16 %v215
    %v254 = vunpack.c.l.b16 %v216
    %v255 = vunpack.c.l.b16 %v217
    %v256 = vunpack.c.l.b16 %v218
    %v257 = vpack.c.b16 %v242, %v241
    %v258 = vpack.c.b16 %v244, %v243
    %v259 = vpack.c.b16 %v246, %v245
    %v260 = vpack.c.b16 %v248, %v247
    %v261 = vpack.c.b16 %v250, %v249
    %v262 = vpack.c.b16 %v252, %v251
    %v263 = vpack.c.b16 %v254, %v253
    %v264 = vpack.c.b16 %v256, %v255
    %273 = vmatprep.subr.bf16.mxu0 0
    %274 = vmatpush1.bf16.msra.mxu0 %v257
    %275 = vmatprep.subr.bf16.mxu0 0
    %276 = vmatpush1.bf16.msra.mxu0 %v258
    %277 = vmatprep.subr.bf16.mxu0 0
    %278 = vmatpush1.bf16.msra.mxu0 %v259
    %279 = vmatprep.subr.bf16.mxu0 0
    %280 = vmatpush1.bf16.msra.mxu0 %v260
    %281 = vmatprep.subr.bf16.mxu0 0
    %282 = vmatpush1.bf16.msra.mxu0 %v261
    %283 = vmatprep.subr.bf16.mxu0 0
    %284 = vmatpush1.bf16.msra.mxu0 %v262
    %285 = vmatprep.subr.bf16.mxu0 0
    %286 = vmatpush1.bf16.msra.mxu0 %v263
    %287 = vmatprep.subr.bf16.mxu0 0
    %288 = vmatpush1.bf16.msra.mxu0 %v264
    %289 = vmatprep.subr.bf16.mxu0 0
    %290 = vmatpush1.bf16.msra.mxu0 0
    %291 = vmatprep.subr.bf16.mxu0 0
    %292 = vmatpush1.bf16.msra.mxu0 0
    %293 = vmatprep.subr.bf16.mxu0 0
    %294 = vmatpush1.bf16.msra.mxu0 0
    %295 = vmatprep.subr.bf16.mxu0 0
    %296 = vmatpush1.bf16.msra.mxu0 0
    %297 = vmatprep.subr.bf16.mxu0 0
    %298 = vmatpush1.bf16.msra.mxu0 0
    %299 = vmatprep.subr.bf16.mxu0 0
    %300 = vmatpush1.bf16.msra.mxu0 0
    %301 = vmatprep.subr.bf16.mxu0 0
    %302 = vmatpush1.bf16.msra.mxu0 0
    %303 = vmatprep.subr.bf16.mxu0 0
    %304 = vmatpush1.bf16.msra.mxu0 0
    %305 = vmatprep.mubr.bf16.mxu0 0
    %306 = vmatmul.mubr.bf16.gmra.mrb[0].mxu0 %v201
    %v307 = vpop.f32.mrb[0].mxu0
    %v308 = vadd.f32 %v223, %v307
    %v309 = vpop.f32.mrb[0].mxu0
    %v310 = vpop.f32.mrb[0].mxu0
    %v311 = vadd.f32 %v223, %v310
    %v312 = vpop.f32.mrb[0].mxu0
    %313 = vmatprep.mubr.bf16.mxu0 0
    %314 = vmatmul.mubr.bf16.gmra.mrb[0].mxu0 %v202
    %v315 = vpop.f32.mrb[0].mxu0
    %v316 = vadd.f32 %v223, %v315
    %v317 = vpop.f32.mrb[0].mxu0
    %v318 = vpop.f32.mrb[0].mxu0
    %v319 = vadd.f32 %v223, %v318
    %v320 = vpop.f32.mrb[0].mxu0
    %321 = vdwg.mxu0
    %v322 = vmax.f32 %v308, 0.0
    %v323 = vmax.f32 %v311, 0.0
    %v324 = vmax.f32 %v316, 0.0
    %v325 = vmax.f32 %v319, 0.0
    %v326 = vpack.c.bf16 %v323, %v322
    %v327 = vpack.c.bf16 %v325, %v324
    %v328 = vld [vmem:[#allocation2 + $0x4] sm:$0xff]
    %v329 = vld [vmem:[#allocation2 + $0x10] sm:$0xff]
    %v330 = vld [vmem:[#allocation2 + $0x1c] sm:$0xff]
    %v331 = vld [vmem:[#allocation2 + $0x28] sm:$0xff]
    %v332 = vld [vmem:[#allocation2 + $0x34] sm:$0xff]
    %v333 = vld [vmem:[#allocation2 + $0x40] sm:$0xff]
    %v334 = vld [vmem:[#allocation2 + $0x4c] sm:$0xff]
    %v335 = vld [vmem:[#allocation2 + $0x58] sm:$0xff]
    %v336 = vld [vmem:[#allocation2 + $0x64] sm:$0xff]
    %v337 = vld [vmem:[#allocation2 + $0x70] sm:$0xff]
    %v338 = vld [vmem:[#allocation2 + $0x7c] sm:$0xff]
    %v339 = vld [vmem:[#allocation2 + $0x88] sm:$0xff]
    %v340 = vld [vmem:[#allocation2 + $0x94] sm:$0xff]
    %v341 = vld [vmem:[#allocation2 + $0xa0] sm:$0xff]
    %v342 = vld [vmem:[#allocation2 + $0xac] sm:$0xff]
    %v343 = vld [vmem:[#allocation2 + $0xb8] sm:$0xff]
    %v345 = vlaneseq
    %v346 = vshrl.u32 %v345, 7
    %v347 = vsub.s32 0, %v346
    %v348 = vrot.slane %v68, %v347
    %v349 = vlaneseq
    %v350 = vshrl.u32 %v349, 7
    %v351 = vsub.s32 1, %v350
    %v352 = vrot.slane %v68, %v351
    %v371 = vunpack.c.l.b16 %v328
    %v372 = vunpack.c.h.b16 %v328
    %v373 = vunpack.c.l.b16 %v329
    %v374 = vunpack.c.h.b16 %v329
    %v375 = vunpack.c.l.b16 %v330
    %v376 = vunpack.c.h.b16 %v330
    %v377 = vunpack.c.l.b16 %v331
    %v378 = vunpack.c.h.b16 %v331
    %v379 = vunpack.c.l.b16 %v332
    %v380 = vunpack.c.h.b16 %v332
    %v381 = vunpack.c.l.b16 %v333
    %v382 = vunpack.c.h.b16 %v333
    %v383 = vunpack.c.l.b16 %v334
    %v384 = vunpack.c.h.b16 %v334
    %v385 = vunpack.c.l.b16 %v335
    %v386 = vunpack.c.h.b16 %v335
    %v387 = vunpack.c.l.b16 %v336
    %v388 = vunpack.c.h.b16 %v336
    %v389 = vunpack.c.l.b16 %v337
    %v390 = vunpack.c.h.b16 %v337
    %v391 = vunpack.c.l.b16 %v338
    %v392 = vunpack.c.h.b16 %v338
    %v393 = vunpack.c.l.b16 %v339
    %v394 = vunpack.c.h.b16 %v339
    %v395 = vunpack.c.l.b16 %v340
    %v396 = vunpack.c.h.b16 %v340
    %v397 = vunpack.c.l.b16 %v341
    %v398 = vunpack.c.h.b16 %v341
    %v399 = vunpack.c.l.b16 %v342
    %v400 = vunpack.c.h.b16 %v342
    %v401 = vunpack.c.l.b16 %v343
    %v402 = vunpack.c.h.b16 %v343
    %v403 = vpack.c.b16 %v373, %v371
    %v404 = vpack.c.b16 %v374, %v372
    %v405 = vpack.c.b16 %v377, %v375
    %v406 = vpack.c.b16 %v378, %v376
    %v407 = vpack.c.b16 %v381, %v379
    %v408 = vpack.c.b16 %v382, %v380
    %v409 = vpack.c.b16 %v385, %v383
    %v410 = vpack.c.b16 %v386, %v384
    %v411 = vpack.c.b16 %v389, %v387
    %v412 = vpack.c.b16 %v390, %v388
    %v413 = vpack.c.b16 %v393, %v391
    %v414 = vpack.c.b16 %v394, %v392
    %v415 = vpack.c.b16 %v397, %v395
    %v416 = vpack.c.b16 %v398, %v396
    %v417 = vpack.c.b16 %v401, %v399
    %v418 = vpack.c.b16 %v402, %v400
    %435 = vmatprep.subr.bf16.mxu0 %v404
    %436 = vmatpush1.bf16.msra.mxu0 %v403
    %437 = vmatprep.subr.bf16.mxu0 %v406
    %438 = vmatpush1.bf16.msra.mxu0 %v405
    %439 = vmatprep.subr.bf16.mxu0 %v408
    %440 = vmatpush1.bf16.msra.mxu0 %v407
    %441 = vmatprep.subr.bf16.mxu0 %v410
    %442 = vmatpush1.bf16.msra.mxu0 %v409
    %443 = vmatprep.subr.bf16.mxu0 %v412
    %444 = vmatpush1.bf16.msra.mxu0 %v411
    %445 = vmatprep.subr.bf16.mxu0 %v414
    %446 = vmatpush1.bf16.msra.mxu0 %v413
    %447 = vmatprep.subr.bf16.mxu0 %v416
    %448 = vmatpush1.bf16.msra.mxu0 %v415
    %449 = vmatprep.subr.bf16.mxu0 %v418
    %450 = vmatpush1.bf16.msra.mxu0 %v417
    %451 = vmatprep.subr.bf16.mxu0 0
    %452 = vmatpush1.bf16.msra.mxu0 0
    %453 = vmatprep.subr.bf16.mxu0 0
    %454 = vmatpush1.bf16.msra.mxu0 0
    %455 = vmatprep.subr.bf16.mxu0 0
    %456 = vmatpush1.bf16.msra.mxu0 0
    %457 = vmatprep.subr.bf16.mxu0 0
    %458 = vmatpush1.bf16.msra.mxu0 0
    %459 = vmatprep.subr.bf16.mxu0 0
    %460 = vmatpush1.bf16.msra.mxu0 0
    %461 = vmatprep.subr.bf16.mxu0 0
    %462 = vmatpush1.bf16.msra.mxu0 0
    %463 = vmatprep.subr.bf16.mxu0 0
    %464 = vmatpush1.bf16.msra.mxu0 0
    %465 = vmatprep.subr.bf16.mxu0 0
    %466 = vmatpush1.bf16.msra.mxu0 0
    %467 = vmatprep.mubr.bf16.mxu0 0
    %468 = vmatmul.mubr.bf16.gmra.mrb[0].mxu0 %v326
    %v469 = vpop.f32.mrb[0].mxu0
    %v470 = vadd.f32 %v348, %v469
    %v471 = vpop.f32.mrb[0].mxu0
    %v472 = vadd.f32 %v352, %v471
    %v473 = vpop.f32.mrb[0].mxu0
    %v474 = vadd.f32 %v348, %v473
    %v475 = vpop.f32.mrb[0].mxu0
    %v476 = vadd.f32 %v352, %v475
    %477 = vmatprep.mubr.bf16.mxu0 0
    %478 = vmatmul.mubr.bf16.gmra.mrb[0].mxu0 %v327
    %v479 = vpop.f32.mrb[0].mxu0
    %v480 = vadd.f32 %v348, %v479
    %v481 = vpop.f32.mrb[0].mxu0
    %v482 = vadd.f32 %v352, %v481
    %v483 = vpop.f32.mrb[0].mxu0
    %v484 = vadd.f32 %v348, %v483
    %v485 = vpop.f32.mrb[0].mxu0
    %v486 = vadd.f32 %v352, %v485
    %487 = vdwg.mxu0
    %v488 = vmax.f32 %v470, 0.0
    %v489 = vmax.f32 %v472, 0.0
    %v490 = vmax.f32 %v474, 0.0
    %v491 = vmax.f32 %v476, 0.0
    %v492 = vmax.f32 %v480, 0.0
    %v493 = vmax.f32 %v482, 0.0
    %v494 = vmax.f32 %v484, 0.0
    %v495 = vmax.f32 %v486, 0.0
    %v496 = vpack.c.bf16 %v490, %v488
    %v497 = vpack.c.bf16 %v491, %v489
    %v498 = vpack.c.bf16 %v494, %v492
    %v499 = vpack.c.bf16 %v495, %v493
    %v500 = vld [vmem:[#allocation5] sm:$0xff]
    %v501 = vld [vmem:[#allocation5 + $0x8] sm:$0xff]
    %v502 = vld [vmem:[#allocation5 + $0x14] sm:$0xff]
    %v503 = vld [vmem:[#allocation5 + $0x1c] sm:$0xff]
    %v504 = vld [vmem:[#allocation5 + $0x28] sm:$0xff]
    %v505 = vld [vmem:[#allocation5 + $0x30] sm:$0xff]
    %v506 = vld [vmem:[#allocation5 + $0x3c] sm:$0xff]
    %v507 = vld [vmem:[#allocation5 + $0x44] sm:$0xff]
    %v508 = vld [vmem:[#allocation5 + $0x50] sm:$0xff]
    %v509 = vld [vmem:[#allocation5 + $0x58] sm:$0xff]
    %v510 = vld [vmem:[#allocation5 + $0x64] sm:$0xff]
    %v511 = vld [vmem:[#allocation5 + $0x6c] sm:$0xff]
    %v512 = vld [vmem:[#allocation5 + $0x78] sm:$0xff]
    %v513 = vld [vmem:[#allocation5 + $0x80] sm:$0xff]
    %v514 = vld [vmem:[#allocation5 + $0x8c] sm:$0xff]
    %v515 = vld [vmem:[#allocation5 + $0x94] sm:$0xff]
    %v516 = vld [vmem:[#allocation5 + $0xa0] sm:$0xff]
    %v517 = vld [vmem:[#allocation5 + $0xa8] sm:$0xff]
    %v518 = vld [vmem:[#allocation5 + $0xb4] sm:$0xff]
    %v519 = vld [vmem:[#allocation5 + $0xbc] sm:$0xff]
    %v520 = vld [vmem:[#allocation5 + $0xc8] sm:$0xff]
    %v521 = vld [vmem:[#allocation5 + $0xd0] sm:$0xff]
    %v522 = vld [vmem:[#allocation5 + $0xdc] sm:$0xff]
    %v523 = vld [vmem:[#allocation5 + $0xe4] sm:$0xff]
    %v524 = vld [vmem:[#allocation5 + $0xf0] sm:$0xff]
    %v525 = vld [vmem:[#allocation5 + $0xf8] sm:$0xff]
    %v526 = vld [vmem:[#allocation5 + $0x104] sm:$0xff]
    %v527 = vld [vmem:[#allocation5 + $0x10c] sm:$0xff]
    %v528 = vld [vmem:[#allocation5 + $0x118] sm:$0xff]
    %v529 = vld [vmem:[#allocation5 + $0x120] sm:$0xff]
    %v530 = vld [vmem:[#allocation5 + $0x12c] sm:$0xff]
    %v531 = vld [vmem:[#allocation5 + $0x134] sm:$0xff]
    %v532 = vld [vmem:[#allocation5 + $0x140] sm:$0xff]
    %v533 = vld [vmem:[#allocation5 + $0x148] sm:$0xff]
    %v534 = vld [vmem:[#allocation5 + $0x154] sm:$0xff]
    %v535 = vld [vmem:[#allocation5 + $0x15c] sm:$0xff]
    %v536 = vld [vmem:[#allocation5 + $0x168] sm:$0xff]
    %v537 = vld [vmem:[#allocation5 + $0x170] sm:$0xff]
    %v538 = vld [vmem:[#allocation5 + $0x17c] sm:$0xff]
    %v539 = vld [vmem:[#allocation5 + $0x184] sm:$0xff]
    %v540 = vld [vmem:[#allocation5 + $0x190] sm:$0xff]
    %v541 = vld [vmem:[#allocation5 + $0x198] sm:$0xff]
    %v542 = vld [vmem:[#allocation5 + $0x1a4] sm:$0xff]
    %v543 = vld [vmem:[#allocation5 + $0x1ac] sm:$0xff]
    %v544 = vld [vmem:[#allocation5 + $0x1b8] sm:$0xff]
    %v545 = vld [vmem:[#allocation5 + $0x1c0] sm:$0xff]
    %v546 = vld [vmem:[#allocation5 + $0x1cc] sm:$0xff]
    %v547 = vld [vmem:[#allocation5 + $0x1d4] sm:$0xff]
    %v548 = vld [vmem:[#allocation5 + $0x1e0] sm:$0xff]
    %v549 = vld [vmem:[#allocation5 + $0x1e8] sm:$0xff]
    %v550 = vld [vmem:[#allocation5 + $0x1f4] sm:$0xff]
    %v551 = vld [vmem:[#allocation5 + $0x1fc] sm:$0xff]
    %v552 = vld [vmem:[#allocation5 + $0x208] sm:$0xff]
    %v553 = vld [vmem:[#allocation5 + $0x210] sm:$0xff]
    %v554 = vld [vmem:[#allocation5 + $0x21c] sm:$0xff]
    %v555 = vld [vmem:[#allocation5 + $0x224] sm:$0xff]
    %v556 = vld [vmem:[#allocation5 + $0x230] sm:$0xff]
    %v557 = vld [vmem:[#allocation5 + $0x238] sm:$0xff]
    %v558 = vld [vmem:[#allocation5 + $0x244] sm:$0xff]
    %v559 = vld [vmem:[#allocation5 + $0x24c] sm:$0xff]
    %v560 = vld [vmem:[#allocation5 + $0x258] sm:$0xff]
    %v561 = vld [vmem:[#allocation5 + $0x260] sm:$0xff]
    %v562 = vld [vmem:[#allocation5 + $0x26c] sm:$0xff]
    %v563 = vld [vmem:[#allocation5 + $0x274] sm:$0xff]
    %v565 = vlaneseq
    %v566 = vshrl.u32 %v565, 7
    %v567 = vsub.s32 0, %v566
    %v568 = vrot.slane %v69, %v567
    %v569 = vlaneseq
    %v570 = vshrl.u32 %v569, 7
    %v571 = vsub.s32 1, %v570
    %v572 = vrot.slane %v69, %v571
    %v573 = vlaneseq
    %v574 = vshrl.u32 %v573, 7
    %v575 = vsub.s32 2, %v574
    %v576 = vrot.slane %v69, %v575
    %v577 = vlaneseq
    %v578 = vshrl.u32 %v577, 7
    %v579 = vsub.s32 3, %v578
    %v580 = vrot.slane %v69, %v579
    %v649 = vunpack.c.l.b16 %v500
    %v650 = vunpack.c.h.b16 %v500
    %v651 = vunpack.c.l.b16 %v501
    %v652 = vunpack.c.h.b16 %v501
    %v653 = vunpack.c.l.b16 %v502
    %v654 = vunpack.c.h.b16 %v502
    %v655 = vunpack.c.l.b16 %v503
    %v656 = vunpack.c.h.b16 %v503
    %v657 = vunpack.c.l.b16 %v504
    %v658 = vunpack.c.h.b16 %v504
    %v659 = vunpack.c.l.b16 %v505
    %v660 = vunpack.c.h.b16 %v505
    %v661 = vunpack.c.l.b16 %v506
    %v662 = vunpack.c.h.b16 %v506
    %v663 = vunpack.c.l.b16 %v507
    %v664 = vunpack.c.h.b16 %v507
    %v665 = vunpack.c.l.b16 %v508
    %v666 = vunpack.c.h.b16 %v508
    %v667 = vunpack.c.l.b16 %v509
    %v668 = vunpack.c.h.b16 %v509
    %v669 = vunpack.c.l.b16 %v510
    %v670 = vunpack.c.h.b16 %v510
    %v671 = vunpack.c.l.b16 %v511
    %v672 = vunpack.c.h.b16 %v511
    %v673 = vunpack.c.l.b16 %v512
    %v674 = vunpack.c.h.b16 %v512
    %v675 = vunpack.c.l.b16 %v513
    %v676 = vunpack.c.h.b16 %v513
    %v677 = vunpack.c.l.b16 %v514
    %v678 = vunpack.c.h.b16 %v514
    %v679 = vunpack.c.l.b16 %v515
    %v680 = vunpack.c.h.b16 %v515
    %v681 = vunpack.c.l.b16 %v516
    %v682 = vunpack.c.h.b16 %v516
    %v683 = vunpack.c.l.b16 %v517
    %v684 = vunpack.c.h.b16 %v517
    %v685 = vunpack.c.l.b16 %v518
    %v686 = vunpack.c.h.b16 %v518
    %v687 = vunpack.c.l.b16 %v519
    %v688 = vunpack.c.h.b16 %v519
    %v689 = vunpack.c.l.b16 %v520
    %v690 = vunpack.c.h.b16 %v520
    %v691 = vunpack.c.l.b16 %v521
    %v692 = vunpack.c.h.b16 %v521
    %v693 = vunpack.c.l.b16 %v522
    %v694 = vunpack.c.h.b16 %v522
    %v695 = vunpack.c.l.b16 %v523
    %v696 = vunpack.c.h.b16 %v523
    %v697 = vunpack.c.l.b16 %v524
    %v698 = vunpack.c.h.b16 %v524
    %v699 = vunpack.c.l.b16 %v525
    %v700 = vunpack.c.h.b16 %v525
    %v701 = vunpack.c.l.b16 %v526
    %v702 = vunpack.c.h.b16 %v526
    %v703 = vunpack.c.l.b16 %v527
    %v704 = vunpack.c.h.b16 %v527
    %v705 = vunpack.c.l.b16 %v528
    %v706 = vunpack.c.h.b16 %v528
    %v707 = vunpack.c.l.b16 %v529
    %v708 = vunpack.c.h.b16 %v529
    %v709 = vunpack.c.l.b16 %v530
    %v710 = vunpack.c.h.b16 %v530
    %v711 = vunpack.c.l.b16 %v531
    %v712 = vunpack.c.h.b16 %v531
    %v713 = vunpack.c.l.b16 %v532
    %v714 = vunpack.c.h.b16 %v532
    %v715 = vunpack.c.l.b16 %v533
    %v716 = vunpack.c.h.b16 %v533
    %v717 = vunpack.c.l.b16 %v534
    %v718 = vunpack.c.h.b16 %v534
    %v719 = vunpack.c.l.b16 %v535
    %v720 = vunpack.c.h.b16 %v535
    %v721 = vunpack.c.l.b16 %v536
    %v722 = vunpack.c.h.b16 %v536
    %v723 = vunpack.c.l.b16 %v537
    %v724 = vunpack.c.h.b16 %v537
    %v725 = vunpack.c.l.b16 %v538
    %v726 = vunpack.c.h.b16 %v538
    %v727 = vunpack.c.l.b16 %v539
    %v728 = vunpack.c.h.b16 %v539
    %v729 = vunpack.c.l.b16 %v540
    %v730 = vunpack.c.h.b16 %v540
    %v731 = vunpack.c.l.b16 %v541
    %v732 = vunpack.c.h.b16 %v541
    %v733 = vunpack.c.l.b16 %v542
    %v734 = vunpack.c.h.b16 %v542
    %v735 = vunpack.c.l.b16 %v543
    %v736 = vunpack.c.h.b16 %v543
    %v737 = vunpack.c.l.b16 %v544
    %v738 = vunpack.c.h.b16 %v544
    %v739 = vunpack.c.l.b16 %v545
    %v740 = vunpack.c.h.b16 %v545
    %v741 = vunpack.c.l.b16 %v546
    %v742 = vunpack.c.h.b16 %v546
    %v743 = vunpack.c.l.b16 %v547
    %v744 = vunpack.c.h.b16 %v547
    %v745 = vunpack.c.l.b16 %v548
    %v746 = vunpack.c.h.b16 %v548
    %v747 = vunpack.c.l.b16 %v549
    %v748 = vunpack.c.h.b16 %v549
    %v749 = vunpack.c.l.b16 %v550
    %v750 = vunpack.c.h.b16 %v550
    %v751 = vunpack.c.l.b16 %v551
    %v752 = vunpack.c.h.b16 %v551
    %v753 = vunpack.c.l.b16 %v552
    %v754 = vunpack.c.h.b16 %v552
    %v755 = vunpack.c.l.b16 %v553
    %v756 = vunpack.c.h.b16 %v553
    %v757 = vunpack.c.l.b16 %v554
    %v758 = vunpack.c.h.b16 %v554
    %v759 = vunpack.c.l.b16 %v555
    %v760 = vunpack.c.h.b16 %v555
    %v761 = vunpack.c.l.b16 %v556
    %v762 = vunpack.c.h.b16 %v556
    %v763 = vunpack.c.l.b16 %v557
    %v764 = vunpack.c.h.b16 %v557
    %v765 = vunpack.c.l.b16 %v558
    %v766 = vunpack.c.h.b16 %v558
    %v767 = vunpack.c.l.b16 %v559
    %v768 = vunpack.c.h.b16 %v559
    %v769 = vunpack.c.l.b16 %v560
    %v770 = vunpack.c.h.b16 %v560
    %v771 = vunpack.c.l.b16 %v561
    %v772 = vunpack.c.h.b16 %v561
    %v773 = vunpack.c.l.b16 %v562
    %v774 = vunpack.c.h.b16 %v562
    %v775 = vunpack.c.l.b16 %v563
    %v776 = vunpack.c.h.b16 %v563
    %v777 = vpack.c.b16 %v653, %v649
    %v778 = vpack.c.b16 %v654, %v650
    %v779 = vpack.c.b16 %v655, %v651
    %v780 = vpack.c.b16 %v656, %v652
    %v781 = vpack.c.b16 %v661, %v657
    %v782 = vpack.c.b16 %v662, %v658
    %v783 = vpack.c.b16 %v663, %v659
    %v784 = vpack.c.b16 %v664, %v660
    %v785 = vpack.c.b16 %v669, %v665
    %v786 = vpack.c.b16 %v670, %v666
    %v787 = vpack.c.b16 %v671, %v667
    %v788 = vpack.c.b16 %v672, %v668
    %v789 = vpack.c.b16 %v677, %v673
    %v790 = vpack.c.b16 %v678, %v674
    %v791 = vpack.c.b16 %v679, %v675
    %v792 = vpack.c.b16 %v680, %v676
    %v793 = vpack.c.b16 %v685, %v681
    %v794 = vpack.c.b16 %v686, %v682
    %v795 = vpack.c.b16 %v687, %v683
    %v796 = vpack.c.b16 %v688, %v684
    %v797 = vpack.c.b16 %v693, %v689
    %v798 = vpack.c.b16 %v694, %v690
    %v799 = vpack.c.b16 %v695, %v691
    %v800 = vpack.c.b16 %v696, %v692
    %v801 = vpack.c.b16 %v701, %v697
    %v802 = vpack.c.b16 %v702, %v698
    %v803 = vpack.c.b16 %v703, %v699
    %v804 = vpack.c.b16 %v704, %v700
    %v805 = vpack.c.b16 %v709, %v705
    %v806 = vpack.c.b16 %v710, %v706
    %v807 = vpack.c.b16 %v711, %v707
    %v808 = vpack.c.b16 %v712, %v708
    %v809 = vpack.c.b16 %v717, %v713
    %v810 = vpack.c.b16 %v718, %v714
    %v811 = vpack.c.b16 %v719, %v715
    %v812 = vpack.c.b16 %v720, %v716
    %v813 = vpack.c.b16 %v725, %v721
    %v814 = vpack.c.b16 %v726, %v722
    %v815 = vpack.c.b16 %v727, %v723
    %v816 = vpack.c.b16 %v728, %v724
    %v817 = vpack.c.b16 %v733, %v729
    %v818 = vpack.c.b16 %v734, %v730
    %v819 = vpack.c.b16 %v735, %v731
    %v820 = vpack.c.b16 %v736, %v732
    %v821 = vpack.c.b16 %v741, %v737
    %v822 = vpack.c.b16 %v742, %v738
    %v823 = vpack.c.b16 %v743, %v739
    %v824 = vpack.c.b16 %v744, %v740
    %v825 = vpack.c.b16 %v749, %v745
    %v826 = vpack.c.b16 %v750, %v746
    %v827 = vpack.c.b16 %v751, %v747
    %v828 = vpack.c.b16 %v752, %v748
    %v829 = vpack.c.b16 %v757, %v753
    %v830 = vpack.c.b16 %v758, %v754
    %v831 = vpack.c.b16 %v759, %v755
    %v832 = vpack.c.b16 %v760, %v756
    %v833 = vpack.c.b16 %v765, %v761
    %v834 = vpack.c.b16 %v766, %v762
    %v835 = vpack.c.b16 %v767, %v763
    %v836 = vpack.c.b16 %v768, %v764
    %v837 = vpack.c.b16 %v773, %v769
    %v838 = vpack.c.b16 %v774, %v770
    %v839 = vpack.c.b16 %v775, %v771
    %v840 = vpack.c.b16 %v776, %v772
    %905 = vmatprep.subr.bf16.mxu0 %v778
    %906 = vmatpush1.bf16.msra.mxu0 %v777
    %907 = vmatprep.subr.bf16.mxu0 %v782
    %908 = vmatpush1.bf16.msra.mxu0 %v781
    %909 = vmatprep.subr.bf16.mxu0 %v786
    %910 = vmatpush1.bf16.msra.mxu0 %v785
    %911 = vmatprep.subr.bf16.mxu0 %v790
    %912 = vmatpush1.bf16.msra.mxu0 %v789
    %913 = vmatprep.subr.bf16.mxu0 %v794
    %914 = vmatpush1.bf16.msra.mxu0 %v793
    %915 = vmatprep.subr.bf16.mxu0 %v798
    %916 = vmatpush1.bf16.msra.mxu0 %v797
    %917 = vmatprep.subr.bf16.mxu0 %v802
    %918 = vmatpush1.bf16.msra.mxu0 %v801
    %919 = vmatprep.subr.bf16.mxu0 %v806
    %920 = vmatpush1.bf16.msra.mxu0 %v805
    %921 = vmatprep.subr.bf16.mxu0 %v810
    %922 = vmatpush1.bf16.msra.mxu0 %v809
    %923 = vmatprep.subr.bf16.mxu0 %v814
    %924 = vmatpush1.bf16.msra.mxu0 %v813
    %925 = vmatprep.subr.bf16.mxu0 %v818
    %926 = vmatpush1.bf16.msra.mxu0 %v817
    %927 = vmatprep.subr.bf16.mxu0 %v822
    %928 = vmatpush1.bf16.msra.mxu0 %v821
    %929 = vmatprep.subr.bf16.mxu0 %v826
    %930 = vmatpush1.bf16.msra.mxu0 %v825
    %931 = vmatprep.subr.bf16.mxu0 %v830
    %932 = vmatpush1.bf16.msra.mxu0 %v829
    %933 = vmatprep.subr.bf16.mxu0 %v834
    %934 = vmatpush1.bf16.msra.mxu0 %v833
    %935 = vmatprep.subr.bf16.mxu0 %v838
    %936 = vmatpush1.bf16.msra.mxu0 %v837
    %937 = vmatprep.mubr.bf16.mxu0 %v497
    %938 = vmatmul.mubr.bf16.gmra.mrb[0].mxu0 %v496
    %v939 = vpop.f32.mrb[0].mxu0
    %v940 = vadd.f32 %v568, %v939
    %v941 = vpop.f32.mrb[0].mxu0
    %v942 = vadd.f32 %v572, %v941
    %v943 = vpop.f32.mrb[0].mxu0
    %v944 = vadd.f32 %v568, %v943
    %v945 = vpop.f32.mrb[0].mxu0
    %v946 = vadd.f32 %v572, %v945
    %947 = vmatprep.mubr.bf16.mxu0 %v499
    %948 = vmatmul.mubr.bf16.gmra.mrb[0].mxu0 %v498
    %v949 = vpop.f32.mrb[0].mxu0
    %v950 = vadd.f32 %v568, %v949
    %v951 = vpop.f32.mrb[0].mxu0
    %v952 = vadd.f32 %v572, %v951
    %v953 = vpop.f32.mrb[0].mxu0
    %v954 = vadd.f32 %v568, %v953
    %v955 = vpop.f32.mrb[0].mxu0
    %v956 = vadd.f32 %v572, %v955
    %957 = vdwg.mxu0
    %958 = vmatprep.subr.bf16.mxu0 %v780
    %959 = vmatpush1.bf16.msra.mxu0 %v779
    %960 = vmatprep.subr.bf16.mxu0 %v784
    %961 = vmatpush1.bf16.msra.mxu0 %v783
    %962 = vmatprep.subr.bf16.mxu0 %v788
    %963 = vmatpush1.bf16.msra.mxu0 %v787
    %964 = vmatprep.subr.bf16.mxu0 %v792
    %965 = vmatpush1.bf16.msra.mxu0 %v791
    %966 = vmatprep.subr.bf16.mxu0 %v796
    %967 = vmatpush1.bf16.msra.mxu0 %v795
    %968 = vmatprep.subr.bf16.mxu0 %v800
    %969 = vmatpush1.bf16.msra.mxu0 %v799
    %970 = vmatprep.subr.bf16.mxu0 %v804
    %971 = vmatpush1.bf16.msra.mxu0 %v803
    %972 = vmatprep.subr.bf16.mxu0 %v808
    %973 = vmatpush1.bf16.msra.mxu0 %v807
    %974 = vmatprep.subr.bf16.mxu0 %v812
    %975 = vmatpush1.bf16.msra.mxu0 %v811
    %976 = vmatprep.subr.bf16.mxu0 %v816
    %977 = vmatpush1.bf16.msra.mxu0 %v815
    %978 = vmatprep.subr.bf16.mxu0 %v820
    %979 = vmatpush1.bf16.msra.mxu0 %v819
    %980 = vmatprep.subr.bf16.mxu0 %v824
    %981 = vmatpush1.bf16.msra.mxu0 %v823
    %982 = vmatprep.subr.bf16.mxu0 %v828
    %983 = vmatpush1.bf16.msra.mxu0 %v827
    %984 = vmatprep.subr.bf16.mxu0 %v832
    %985 = vmatpush1.bf16.msra.mxu0 %v831
    %986 = vmatprep.subr.bf16.mxu0 %v836
    %987 = vmatpush1.bf16.msra.mxu0 %v835
    %988 = vmatprep.subr.bf16.mxu0 %v840
    %989 = vmatpush1.bf16.msra.mxu0 %v839
    %990 = vmatprep.mubr.bf16.mxu0 %v497
    %991 = vmatmul.mubr.bf16.gmra.mrb[0].mxu0 %v496
    %v992 = vpop.f32.mrb[0].mxu0
    %v993 = vadd.f32 %v576, %v992
    %v994 = vpop.f32.mrb[0].mxu0
    %v995 = vadd.f32 %v580, %v994
    %v996 = vpop.f32.mrb[0].mxu0
    %v997 = vadd.f32 %v576, %v996
    %v998 = vpop.f32.mrb[0].mxu0
    %v999 = vadd.f32 %v580, %v998
    %1000 = vmatprep.mubr.bf16.mxu0 %v499
    %1001 = vmatmul.mubr.bf16.gmra.mrb[0].mxu0 %v498
    %v1002 = vpop.f32.mrb[0].mxu0
    %v1003 = vadd.f32 %v576, %v1002
    %v1004 = vpop.f32.mrb[0].mxu0
    %v1005 = vadd.f32 %v580, %v1004
    %v1006 = vpop.f32.mrb[0].mxu0
    %v1007 = vadd.f32 %v576, %v1006
    %v1008 = vpop.f32.mrb[0].mxu0
    %v1009 = vadd.f32 %v580, %v1008
    %1010 = vdwg.mxu0
    %v1011 = vmax.f32 %v940, %v944
    %v1012 = vrot.slane %v1011, 4
    %v1013 = vmax.f32 %v1011, %v1012
    %v1014 = vrot.slane %v1013, 2
    %v1015 = vmax.f32 %v1013, %v1014
    %v1016 = vrot.slane %v1015, 1
    %v1017 = vmax.f32 %v1015, %v1016
    %v1018 = vmax.f32 %v942, %v946
    %v1019 = vrot.slane %v1018, 4
    %v1020 = vmax.f32 %v1018, %v1019
    %v1021 = vrot.slane %v1020, 2
    %v1022 = vmax.f32 %v1020, %v1021
    %v1023 = vrot.slane %v1022, 1
    %v1024 = vmax.f32 %v1022, %v1023
    %v1025 = vmax.f32 %v993, %v997
    %v1026 = vrot.slane %v1025, 4
    %v1027 = vmax.f32 %v1025, %v1026
    %v1028 = vrot.slane %v1027, 2
    %v1029 = vmax.f32 %v1027, %v1028
    %v1030 = vrot.slane %v1029, 1
    %v1031 = vmax.f32 %v1029, %v1030
    %v1032 = vmax.f32 %v995, %v999
    %v1033 = vrot.slane %v1032, 4
    %v1034 = vmax.f32 %v1032, %v1033
    %v1035 = vrot.slane %v1034, 2
    %v1036 = vmax.f32 %v1034, %v1035
    %v1037 = vrot.slane %v1036, 1
    %v1038 = vmax.f32 %v1036, %v1037
    %v1039 = vmax.f32 %v950, %v954
    %v1040 = vrot.slane %v1039, 4
    %v1041 = vmax.f32 %v1039, %v1040
    %v1042 = vrot.slane %v1041, 2
    %v1043 = vmax.f32 %v1041, %v1042
    %v1044 = vrot.slane %v1043, 1
    %v1045 = vmax.f32 %v1043, %v1044
    %v1046 = vmax.f32 %v952, %v956
    %v1047 = vrot.slane %v1046, 4
    %v1048 = vmax.f32 %v1046, %v1047
    %v1049 = vrot.slane %v1048, 2
    %v1050 = vmax.f32 %v1048, %v1049
    %v1051 = vrot.slane %v1050, 1
    %v1052 = vmax.f32 %v1050, %v1051
    %v1053 = vmax.f32 %v1003, %v1007
    %v1054 = vrot.slane %v1053, 4
    %v1055 = vmax.f32 %v1053, %v1054
    %v1056 = vrot.slane %v1055, 2
    %v1057 = vmax.f32 %v1055, %v1056
    %v1058 = vrot.slane %v1057, 1
    %v1059 = vmax.f32 %v1057, %v1058
    %v1060 = vmax.f32 %v1005, %v1009
    %v1061 = vrot.slane %v1060, 4
    %v1062 = vmax.f32 %v1060, %v1061
    %v1063 = vrot.slane %v1062, 2
    %v1064 = vmax.f32 %v1062, %v1063
    %v1065 = vrot.slane %v1064, 1
    %v1066 = vmax.f32 %v1064, %v1065
    %v1067 = vpack.c.bf16 %v1017, %v1017
    %v1068 = vpack.c.bf16 %v1024, %v1024
    %v1069 = vpack.c.bf16 %v1031, %v1031
    %v1070 = vpack.c.bf16 %v1038, %v1038
    %v1071 = vpack.c.bf16 %v1045, %v1045
    %v1072 = vpack.c.bf16 %v1052, %v1052
    %v1073 = vpack.c.bf16 %v1059, %v1059
    %v1074 = vpack.c.bf16 %v1066, %v1066
    %v1075 = vld [vmem:[#allocation7] sm:$0xff]
    %v1076 = vld [vmem:[#allocation7 + $0x8] sm:$0xff]
    %v1077 = vld [vmem:[#allocation7 + $0x18] sm:$0xff]
    %v1078 = vld [vmem:[#allocation7 + $0x20] sm:$0xff]
    %v1079 = vld [vmem:[#allocation7 + $0x30] sm:$0xff]
    %v1080 = vld [vmem:[#allocation7 + $0x38] sm:$0xff]
    %v1081 = vld [vmem:[#allocation7 + $0x48] sm:$0xff]
    %v1082 = vld [vmem:[#allocation7 + $0x50] sm:$0xff]
    %v1083 = vld [vmem:[#allocation7 + $0x60] sm:$0xff]
    %v1084 = vld [vmem:[#allocation7 + $0x68] sm:$0xff]
    %v1085 = vld [vmem:[#allocation7 + $0x78] sm:$0xff]
    %v1086 = vld [vmem:[#allocation7 + $0x80] sm:$0xff]
    %v1087 = vld [vmem:[#allocation7 + $0x90] sm:$0xff]
    %v1088 = vld [vmem:[#allocation7 + $0x98] sm:$0xff]
    %v1089 = vld [vmem:[#allocation7 + $0xa8] sm:$0xff]
    %v1090 = vld [vmem:[#allocation7 + $0xb0] sm:$0xff]
    %v1091 = vld [vmem:[#allocation7 + $0xc0] sm:$0xff]
    %v1092 = vld [vmem:[#allocation7 + $0xc8] sm:$0xff]
    %v1093 = vld [vmem:[#allocation7 + $0xd8] sm:$0xff]
    %v1094 = vld [vmem:[#allocation7 + $0xe0] sm:$0xff]
    %v1095 = vld [vmem:[#allocation7 + $0xf0] sm:$0xff]
    %v1096 = vld [vmem:[#allocation7 + $0xf8] sm:$0xff]
    %v1097 = vld [vmem:[#allocation7 + $0x108] sm:$0xff]
    %v1098 = vld [vmem:[#allocation7 + $0x110] sm:$0xff]
    %v1099 = vld [vmem:[#allocation7 + $0x120] sm:$0xff]
    %v1100 = vld [vmem:[#allocation7 + $0x128] sm:$0xff]
    %v1101 = vld [vmem:[#allocation7 + $0x138] sm:$0xff]
    %v1102 = vld [vmem:[#allocation7 + $0x140] sm:$0xff]
    %v1103 = vld [vmem:[#allocation7 + $0x150] sm:$0xff]
    %v1104 = vld [vmem:[#allocation7 + $0x158] sm:$0xff]
    %v1105 = vld [vmem:[#allocation7 + $0x168] sm:$0xff]
    %v1106 = vld [vmem:[#allocation7 + $0x170] sm:$0xff]
    %v1107 = vld [vmem:[#allocation7 + $0x180] sm:$0xff]
    %v1108 = vld [vmem:[#allocation7 + $0x188] sm:$0xff]
    %v1109 = vld [vmem:[#allocation7 + $0x198] sm:$0xff]
    %v1110 = vld [vmem:[#allocation7 + $0x1a0] sm:$0xff]
    %v1111 = vld [vmem:[#allocation7 + $0x1b0] sm:$0xff]
    %v1112 = vld [vmem:[#allocation7 + $0x1b8] sm:$0xff]
    %v1113 = vld [vmem:[#allocation7 + $0x1c8] sm:$0xff]
    %v1114 = vld [vmem:[#allocation7 + $0x1d0] sm:$0xff]
    %v1115 = vld [vmem:[#allocation7 + $0x1e0] sm:$0xff]
    %v1116 = vld [vmem:[#allocation7 + $0x1e8] sm:$0xff]
    %v1117 = vld [vmem:[#allocation7 + $0x1f8] sm:$0xff]
    %v1118 = vld [vmem:[#allocation7 + $0x200] sm:$0xff]
    %v1119 = vld [vmem:[#allocation7 + $0x210] sm:$0xff]
    %v1120 = vld [vmem:[#allocation7 + $0x218] sm:$0xff]
    %v1121 = vld [vmem:[#allocation7 + $0x228] sm:$0xff]
    %v1122 = vld [vmem:[#allocation7 + $0x230] sm:$0xff]
    %v1123 = vld [vmem:[#allocation7 + $0x240] sm:$0xff]
    %v1124 = vld [vmem:[#allocation7 + $0x248] sm:$0xff]
    %v1125 = vld [vmem:[#allocation7 + $0x258] sm:$0xff]
    %v1126 = vld [vmem:[#allocation7 + $0x260] sm:$0xff]
    %v1127 = vld [vmem:[#allocation7 + $0x270] sm:$0xff]
    %v1128 = vld [vmem:[#allocation7 + $0x278] sm:$0xff]
    %v1129 = vld [vmem:[#allocation7 + $0x288] sm:$0xff]
    %v1130 = vld [vmem:[#allocation7 + $0x290] sm:$0xff]
    %v1131 = vld [vmem:[#allocation7 + $0x2a0] sm:$0xff]
    %v1132 = vld [vmem:[#allocation7 + $0x2a8] sm:$0xff]
    %v1133 = vld [vmem:[#allocation7 + $0x2b8] sm:$0xff]
    %v1134 = vld [vmem:[#allocation7 + $0x2c0] sm:$0xff]
    %v1135 = vld [vmem:[#allocation7 + $0x2d0] sm:$0xff]
    %v1136 = vld [vmem:[#allocation7 + $0x2d8] sm:$0xff]
    %v1137 = vld [vmem:[#allocation7 + $0x2e8] sm:$0xff]
    %v1138 = vld [vmem:[#allocation7 + $0x2f0] sm:$0xff]
    %v1139 = vld [vmem:[#allocation7 + $0x300] sm:$0xff]
    %v1140 = vld [vmem:[#allocation7 + $0x308] sm:$0xff]
    %v1141 = vld [vmem:[#allocation7 + $0x318] sm:$0xff]
    %v1142 = vld [vmem:[#allocation7 + $0x320] sm:$0xff]
    %v1143 = vld [vmem:[#allocation7 + $0x330] sm:$0xff]
    %v1144 = vld [vmem:[#allocation7 + $0x338] sm:$0xff]
    %v1145 = vld [vmem:[#allocation7 + $0x348] sm:$0xff]
    %v1146 = vld [vmem:[#allocation7 + $0x350] sm:$0xff]
    %v1147 = vld [vmem:[#allocation7 + $0x360] sm:$0xff]
    %v1148 = vld [vmem:[#allocation7 + $0x368] sm:$0xff]
    %v1149 = vld [vmem:[#allocation7 + $0x378] sm:$0xff]
    %v1150 = vld [vmem:[#allocation7 + $0x380] sm:$0xff]
    %v1151 = vld [vmem:[#allocation7 + $0x390] sm:$0xff]
    %v1152 = vld [vmem:[#allocation7 + $0x398] sm:$0xff]
    %v1153 = vld [vmem:[#allocation7 + $0x3a8] sm:$0xff]
    %v1154 = vld [vmem:[#allocation7 + $0x3b0] sm:$0xff]
    %v1155 = vld [vmem:[#allocation7 + $0x3c0] sm:$0xff]
    %v1156 = vld [vmem:[#allocation7 + $0x3c8] sm:$0xff]
    %v1157 = vld [vmem:[#allocation7 + $0x3d8] sm:$0xff]
    %v1158 = vld [vmem:[#allocation7 + $0x3e0] sm:$0xff]
    %v1159 = vld [vmem:[#allocation7 + $0x3f0] sm:$0xff]
    %v1160 = vld [vmem:[#allocation7 + $0x3f8] sm:$0xff]
    %v1161 = vld [vmem:[#allocation7 + $0x408] sm:$0xff]
    %v1162 = vld [vmem:[#allocation7 + $0x410] sm:$0xff]
    %v1163 = vld [vmem:[#allocation7 + $0x420] sm:$0xff]
    %v1164 = vld [vmem:[#allocation7 + $0x428] sm:$0xff]
    %v1165 = vld [vmem:[#allocation7 + $0x438] sm:$0xff]
    %v1166 = vld [vmem:[#allocation7 + $0x440] sm:$0xff]
    %v1167 = vld [vmem:[#allocation7 + $0x450] sm:$0xff]
    %v1168 = vld [vmem:[#allocation7 + $0x458] sm:$0xff]
    %v1169 = vld [vmem:[#allocation7 + $0x468] sm:$0xff]
    %v1170 = vld [vmem:[#allocation7 + $0x470] sm:$0xff]
    %v1171 = vld [vmem:[#allocation7 + $0x480] sm:$0xff]
    %v1172 = vld [vmem:[#allocation7 + $0x488] sm:$0xff]
    %v1173 = vld [vmem:[#allocation7 + $0x498] sm:$0xff]
    %v1174 = vld [vmem:[#allocation7 + $0x4a0] sm:$0xff]
    %v1175 = vld [vmem:[#allocation7 + $0x4b0] sm:$0xff]
    %v1176 = vld [vmem:[#allocation7 + $0x4b8] sm:$0xff]
    %v1177 = vld [vmem:[#allocation7 + $0x4c8] sm:$0xff]
    %v1178 = vld [vmem:[#allocation7 + $0x4d0] sm:$0xff]
    %v1179 = vld [vmem:[#allocation7 + $0x4e0] sm:$0xff]
    %v1180 = vld [vmem:[#allocation7 + $0x4e8] sm:$0xff]
    %v1181 = vld [vmem:[#allocation7 + $0x4f8] sm:$0xff]
    %v1182 = vld [vmem:[#allocation7 + $0x500] sm:$0xff]
    %v1183 = vld [vmem:[#allocation7 + $0x510] sm:$0xff]
    %v1184 = vld [vmem:[#allocation7 + $0x518] sm:$0xff]
    %v1185 = vld [vmem:[#allocation7 + $0x528] sm:$0xff]
    %v1186 = vld [vmem:[#allocation7 + $0x530] sm:$0xff]
    %v1187 = vld [vmem:[#allocation7 + $0x540] sm:$0xff]
    %v1188 = vld [vmem:[#allocation7 + $0x548] sm:$0xff]
    %v1189 = vld [vmem:[#allocation7 + $0x558] sm:$0xff]
    %v1190 = vld [vmem:[#allocation7 + $0x560] sm:$0xff]
    %v1191 = vld [vmem:[#allocation7 + $0x570] sm:$0xff]
    %v1192 = vld [vmem:[#allocation7 + $0x578] sm:$0xff]
    %v1193 = vld [vmem:[#allocation7 + $0x588] sm:$0xff]
    %v1194 = vld [vmem:[#allocation7 + $0x590] sm:$0xff]
    %v1195 = vld [vmem:[#allocation7 + $0x5a0] sm:$0xff]
    %v1196 = vld [vmem:[#allocation7 + $0x5a8] sm:$0xff]
    %v1197 = vld [vmem:[#allocation7 + $0x5b8] sm:$0xff]
    %v1198 = vld [vmem:[#allocation7 + $0x5c0] sm:$0xff]
    %v1199 = vld [vmem:[#allocation7 + $0x5d0] sm:$0xff]
    %v1200 = vld [vmem:[#allocation7 + $0x5d8] sm:$0xff]
    %v1201 = vld [vmem:[#allocation7 + $0x5e8] sm:$0xff]
    %v1202 = vld [vmem:[#allocation7 + $0x5f0] sm:$0xff]
    %v1204 = vlaneseq
    %v1205 = vshrl.u32 %v1204, 7
    %v1206 = vsub.s32 0, %v1205
    %v1207 = vrot.slane %v70, %v1206
    %v1208 = vlaneseq
    %v1209 = vshrl.u32 %v1208, 7
    %v1210 = vsub.s32 1, %v1209
    %v1211 = vrot.slane %v70, %v1210
    %v1212 = vlaneseq
    %v1213 = vshrl.u32 %v1212, 7
    %v1214 = vsub.s32 2, %v1213
    %v1215 = vrot.slane %v70, %v1214
    %v1216 = vlaneseq
    %v1217 = vshrl.u32 %v1216, 7
    %v1218 = vsub.s32 3, %v1217
    %v1219 = vrot.slane %v70, %v1218
    %v1232 = vunpack.c.l.b16 %v1067
    %v1233 = vunpack.c.l.b16 %v1068
    %v1234 = vunpack.c.l.b16 %v1069
    %v1235 = vunpack.c.l.b16 %v1070
    %v1236 = vunpack.c.l.b16 %v1071
    %v1237 = vunpack.c.l.b16 %v1072
    %v1238 = vunpack.c.l.b16 %v1073
    %v1239 = vunpack.c.l.b16 %v1074
    %vm1240 = vcmask 1041409
    %v1241 = vsel %vm1240, %v1236, %v1232
    %v1242 = vsel %vm1240, %v1237, %v1233
    %v1243 = vsel %vm1240, %v1238, %v1234
    %v1244 = vsel %vm1240, %v1239, %v1235
    %v1245 = vpack.c.b16 %v1241, %v1241
    %v1246 = vpack.c.b16 %v1242, %v1242
    %v1247 = vpack.c.b16 %v1243, %v1243
    %v1248 = vpack.c.b16 %v1244, %v1244
    %v1381 = vunpack.c.l.b16 %v1075
    %v1382 = vunpack.c.h.b16 %v1075
    %v1383 = vunpack.c.l.b16 %v1076
    %v1384 = vunpack.c.h.b16 %v1076
    %v1385 = vunpack.c.l.b16 %v1077
    %v1386 = vunpack.c.h.b16 %v1077
    %v1387 = vunpack.c.l.b16 %v1078
    %v1388 = vunpack.c.h.b16 %v1078
    %v1389 = vunpack.c.l.b16 %v1079
    %v1390 = vunpack.c.h.b16 %v1079
    %v1391 = vunpack.c.l.b16 %v1080
    %v1392 = vunpack.c.h.b16 %v1080
    %v1393 = vunpack.c.l.b16 %v1081
    %v1394 = vunpack.c.h.b16 %v1081
    %v1395 = vunpack.c.l.b16 %v1082
    %v1396 = vunpack.c.h.b16 %v1082
    %v1397 = vunpack.c.l.b16 %v1083
    %v1398 = vunpack.c.h.b16 %v1083
    %v1399 = vunpack.c.l.b16 %v1084
    %v1400 = vunpack.c.h.b16 %v1084
    %v1401 = vunpack.c.l.b16 %v1085
    %v1402 = vunpack.c.h.b16 %v1085
    %v1403 = vunpack.c.l.b16 %v1086
    %v1404 = vunpack.c.h.b16 %v1086
    %v1405 = vunpack.c.l.b16 %v1087
    %v1406 = vunpack.c.h.b16 %v1087
    %v1407 = vunpack.c.l.b16 %v1088
    %v1408 = vunpack.c.h.b16 %v1088
    %v1409 = vunpack.c.l.b16 %v1089
    %v1410 = vunpack.c.h.b16 %v1089
    %v1411 = vunpack.c.l.b16 %v1090
    %v1412 = vunpack.c.h.b16 %v1090
    %v1413 = vunpack.c.l.b16 %v1091
    %v1414 = vunpack.c.h.b16 %v1091
    %v1415 = vunpack.c.l.b16 %v1092
    %v1416 = vunpack.c.h.b16 %v1092
    %v1417 = vunpack.c.l.b16 %v1093
    %v1418 = vunpack.c.h.b16 %v1093
    %v1419 = vunpack.c.l.b16 %v1094
    %v1420 = vunpack.c.h.b16 %v1094
    %v1421 = vunpack.c.l.b16 %v1095
    %v1422 = vunpack.c.h.b16 %v1095
    %v1423 = vunpack.c.l.b16 %v1096
    %v1424 = vunpack.c.h.b16 %v1096
    %v1425 = vunpack.c.l.b16 %v1097
    %v1426 = vunpack.c.h.b16 %v1097
    %v1427 = vunpack.c.l.b16 %v1098
    %v1428 = vunpack.c.h.b16 %v1098
    %v1429 = vunpack.c.l.b16 %v1099
    %v1430 = vunpack.c.h.b16 %v1099
    %v1431 = vunpack.c.l.b16 %v1100
    %v1432 = vunpack.c.h.b16 %v1100
    %v1433 = vunpack.c.l.b16 %v1101
    %v1434 = vunpack.c.h.b16 %v1101
    %v1435 = vunpack.c.l.b16 %v1102
    %v1436 = vunpack.c.h.b16 %v1102
    %v1437 = vunpack.c.l.b16 %v1103
    %v1438 = vunpack.c.h.b16 %v1103
    %v1439 = vunpack.c.l.b16 %v1104
    %v1440 = vunpack.c.h.b16 %v1104
    %v1441 = vunpack.c.l.b16 %v1105
    %v1442 = vunpack.c.h.b16 %v1105
    %v1443 = vunpack.c.l.b16 %v1106
    %v1444 = vunpack.c.h.b16 %v1106
    %v1445 = vunpack.c.l.b16 %v1107
    %v1446 = vunpack.c.h.b16 %v1107
    %v1447 = vunpack.c.l.b16 %v1108
    %v1448 = vunpack.c.h.b16 %v1108
    %v1449 = vunpack.c.l.b16 %v1109
    %v1450 = vunpack.c.h.b16 %v1109
    %v1451 = vunpack.c.l.b16 %v1110
    %v1452 = vunpack.c.h.b16 %v1110
    %v1453 = vunpack.c.l.b16 %v1111
    %v1454 = vunpack.c.h.b16 %v1111
    %v1455 = vunpack.c.l.b16 %v1112
    %v1456 = vunpack.c.h.b16 %v1112
    %v1457 = vunpack.c.l.b16 %v1113
    %v1458 = vunpack.c.h.b16 %v1113
    %v1459 = vunpack.c.l.b16 %v1114
    %v1460 = vunpack.c.h.b16 %v1114
    %v1461 = vunpack.c.l.b16 %v1115
    %v1462 = vunpack.c.h.b16 %v1115
    %v1463 = vunpack.c.l.b16 %v1116
    %v1464 = vunpack.c.h.b16 %v1116
    %v1465 = vunpack.c.l.b16 %v1117
    %v1466 = vunpack.c.h.b16 %v1117
    %v1467 = vunpack.c.l.b16 %v1118
    %v1468 = vunpack.c.h.b16 %v1118
    %v1469 = vunpack.c.l.b16 %v1119
    %v1470 = vunpack.c.h.b16 %v1119
    %v1471 = vunpack.c.l.b16 %v1120
    %v1472 = vunpack.c.h.b16 %v1120
    %v1473 = vunpack.c.l.b16 %v1121
    %v1474 = vunpack.c.h.b16 %v1121
    %v1475 = vunpack.c.l.b16 %v1122
    %v1476 = vunpack.c.h.b16 %v1122
    %v1477 = vunpack.c.l.b16 %v1123
    %v1478 = vunpack.c.h.b16 %v1123
    %v1479 = vunpack.c.l.b16 %v1124
    %v1480 = vunpack.c.h.b16 %v1124
    %v1481 = vunpack.c.l.b16 %v1125
    %v1482 = vunpack.c.h.b16 %v1125
    %v1483 = vunpack.c.l.b16 %v1126
    %v1484 = vunpack.c.h.b16 %v1126
    %v1485 = vunpack.c.l.b16 %v1127
    %v1486 = vunpack.c.h.b16 %v1127
    %v1487 = vunpack.c.l.b16 %v1128
    %v1488 = vunpack.c.h.b16 %v1128
    %v1489 = vunpack.c.l.b16 %v1129
    %v1490 = vunpack.c.h.b16 %v1129
    %v1491 = vunpack.c.l.b16 %v1130
    %v1492 = vunpack.c.h.b16 %v1130
    %v1493 = vunpack.c.l.b16 %v1131
    %v1494 = vunpack.c.h.b16 %v1131
    %v1495 = vunpack.c.l.b16 %v1132
    %v1496 = vunpack.c.h.b16 %v1132
    %v1497 = vunpack.c.l.b16 %v1133
    %v1498 = vunpack.c.h.b16 %v1133
    %v1499 = vunpack.c.l.b16 %v1134
    %v1500 = vunpack.c.h.b16 %v1134
    %v1501 = vunpack.c.l.b16 %v1135
    %v1502 = vunpack.c.h.b16 %v1135
    %v1503 = vunpack.c.l.b16 %v1136
    %v1504 = vunpack.c.h.b16 %v1136
    %v1505 = vunpack.c.l.b16 %v1137
    %v1506 = vunpack.c.h.b16 %v1137
    %v1507 = vunpack.c.l.b16 %v1138
    %v1508 = vunpack.c.h.b16 %v1138
    %v1509 = vunpack.c.l.b16 %v1139
    %v1510 = vunpack.c.h.b16 %v1139
    %v1511 = vunpack.c.l.b16 %v1140
    %v1512 = vunpack.c.h.b16 %v1140
    %v1513 = vunpack.c.l.b16 %v1141
    %v1514 = vunpack.c.h.b16 %v1141
    %v1515 = vunpack.c.l.b16 %v1142
    %v1516 = vunpack.c.h.b16 %v1142
    %v1517 = vunpack.c.l.b16 %v1143
    %v1518 = vunpack.c.h.b16 %v1143
    %v1519 = vunpack.c.l.b16 %v1144
    %v1520 = vunpack.c.h.b16 %v1144
    %v1521 = vunpack.c.l.b16 %v1145
    %v1522 = vunpack.c.h.b16 %v1145
    %v1523 = vunpack.c.l.b16 %v1146
    %v1524 = vunpack.c.h.b16 %v1146
    %v1525 = vunpack.c.l.b16 %v1147
    %v1526 = vunpack.c.h.b16 %v1147
    %v1527 = vunpack.c.l.b16 %v1148
    %v1528 = vunpack.c.h.b16 %v1148
    %v1529 = vunpack.c.l.b16 %v1149
    %v1530 = vunpack.c.h.b16 %v1149
    %v1531 = vunpack.c.l.b16 %v1150
    %v1532 = vunpack.c.h.b16 %v1150
    %v1533 = vunpack.c.l.b16 %v1151
    %v1534 = vunpack.c.h.b16 %v1151
    %v1535 = vunpack.c.l.b16 %v1152
    %v1536 = vunpack.c.h.b16 %v1152
    %v1537 = vunpack.c.l.b16 %v1153
    %v1538 = vunpack.c.h.b16 %v1153
    %v1539 = vunpack.c.l.b16 %v1154
    %v1540 = vunpack.c.h.b16 %v1154
    %v1541 = vunpack.c.l.b16 %v1155
    %v1542 = vunpack.c.h.b16 %v1155
    %v1543 = vunpack.c.l.b16 %v1156
    %v1544 = vunpack.c.h.b16 %v1156
    %v1545 = vunpack.c.l.b16 %v1157
    %v1546 = vunpack.c.h.b16 %v1157
    %v1547 = vunpack.c.l.b16 %v1158
    %v1548 = vunpack.c.h.b16 %v1158
    %v1549 = vunpack.c.l.b16 %v1159
    %v1550 = vunpack.c.h.b16 %v1159
    %v1551 = vunpack.c.l.b16 %v1160
    %v1552 = vunpack.c.h.b16 %v1160
    %v1553 = vunpack.c.l.b16 %v1161
    %v1554 = vunpack.c.h.b16 %v1161
    %v1555 = vunpack.c.l.b16 %v1162
    %v1556 = vunpack.c.h.b16 %v1162
    %v1557 = vunpack.c.l.b16 %v1163
    %v1558 = vunpack.c.h.b16 %v1163
    %v1559 = vunpack.c.l.b16 %v1164
    %v1560 = vunpack.c.h.b16 %v1164
    %v1561 = vunpack.c.l.b16 %v1165
    %v1562 = vunpack.c.h.b16 %v1165
    %v1563 = vunpack.c.l.b16 %v1166
    %v1564 = vunpack.c.h.b16 %v1166
    %v1565 = vunpack.c.l.b16 %v1167
    %v1566 = vunpack.c.h.b16 %v1167
    %v1567 = vunpack.c.l.b16 %v1168
    %v1568 = vunpack.c.h.b16 %v1168
    %v1569 = vunpack.c.l.b16 %v1169
    %v1570 = vunpack.c.h.b16 %v1169
    %v1571 = vunpack.c.l.b16 %v1170
    %v1572 = vunpack.c.h.b16 %v1170
    %v1573 = vunpack.c.l.b16 %v1171
    %v1574 = vunpack.c.h.b16 %v1171
    %v1575 = vunpack.c.l.b16 %v1172
    %v1576 = vunpack.c.h.b16 %v1172
    %v1577 = vunpack.c.l.b16 %v1173
    %v1578 = vunpack.c.h.b16 %v1173
    %v1579 = vunpack.c.l.b16 %v1174
    %v1580 = vunpack.c.h.b16 %v1174
    %v1581 = vunpack.c.l.b16 %v1175
    %v1582 = vunpack.c.h.b16 %v1175
    %v1583 = vunpack.c.l.b16 %v1176
    %v1584 = vunpack.c.h.b16 %v1176
    %v1585 = vunpack.c.l.b16 %v1177
    %v1586 = vunpack.c.h.b16 %v1177
    %v1587 = vunpack.c.l.b16 %v1178
    %v1588 = vunpack.c.h.b16 %v1178
    %v1589 = vunpack.c.l.b16 %v1179
    %v1590 = vunpack.c.h.b16 %v1179
    %v1591 = vunpack.c.l.b16 %v1180
    %v1592 = vunpack.c.h.b16 %v1180
    %v1593 = vunpack.c.l.b16 %v1181
    %v1594 = vunpack.c.h.b16 %v1181
    %v1595 = vunpack.c.l.b16 %v1182
    %v1596 = vunpack.c.h.b16 %v1182
    %v1597 = vunpack.c.l.b16 %v1183
    %v1598 = vunpack.c.h.b16 %v1183
    %v1599 = vunpack.c.l.b16 %v1184
    %v1600 = vunpack.c.h.b16 %v1184
    %v1601 = vunpack.c.l.b16 %v1185
    %v1602 = vunpack.c.h.b16 %v1185
    %v1603 = vunpack.c.l.b16 %v1186
    %v1604 = vunpack.c.h.b16 %v1186
    %v1605 = vunpack.c.l.b16 %v1187
    %v1606 = vunpack.c.h.b16 %v1187
    %v1607 = vunpack.c.l.b16 %v1188
    %v1608 = vunpack.c.h.b16 %v1188
    %v1609 = vunpack.c.l.b16 %v1189
    %v1610 = vunpack.c.h.b16 %v1189
    %v1611 = vunpack.c.l.b16 %v1190
    %v1612 = vunpack.c.h.b16 %v1190
    %v1613 = vunpack.c.l.b16 %v1191
    %v1614 = vunpack.c.h.b16 %v1191
    %v1615 = vunpack.c.l.b16 %v1192
    %v1616 = vunpack.c.h.b16 %v1192
    %v1617 = vunpack.c.l.b16 %v1193
    %v1618 = vunpack.c.h.b16 %v1193
    %v1619 = vunpack.c.l.b16 %v1194
    %v1620 = vunpack.c.h.b16 %v1194
    %v1621 = vunpack.c.l.b16 %v1195
    %v1622 = vunpack.c.h.b16 %v1195
    %v1623 = vunpack.c.l.b16 %v1196
    %v1624 = vunpack.c.h.b16 %v1196
    %v1625 = vunpack.c.l.b16 %v1197
    %v1626 = vunpack.c.h.b16 %v1197
    %v1627 = vunpack.c.l.b16 %v1198
    %v1628 = vunpack.c.h.b16 %v1198
    %v1629 = vunpack.c.l.b16 %v1199
    %v1630 = vunpack.c.h.b16 %v1199
    %v1631 = vunpack.c.l.b16 %v1200
    %v1632 = vunpack.c.h.b16 %v1200
    %v1633 = vunpack.c.l.b16 %v1201
    %v1634 = vunpack.c.h.b16 %v1201
    %v1635 = vunpack.c.l.b16 %v1202
    %v1636 = vunpack.c.h.b16 %v1202
    %v1637 = vpack.c.b16 %v1385, %v1381
    %v1638 = vpack.c.b16 %v1386, %v1382
    %v1639 = vpack.c.b16 %v1387, %v1383
    %v1640 = vpack.c.b16 %v1388, %v1384
    %v1641 = vpack.c.b16 %v1393, %v1389
    %v1642 = vpack.c.b16 %v1394, %v1390
    %v1643 = vpack.c.b16 %v1395, %v1391
    %v1644 = vpack.c.b16 %v1396, %v1392
    %v1645 = vpack.c.b16 %v1401, %v1397
    %v1646 = vpack.c.b16 %v1402, %v1398
    %v1647 = vpack.c.b16 %v1403, %v1399
    %v1648 = vpack.c.b16 %v1404, %v1400
    %v1649 = vpack.c.b16 %v1409, %v1405
    %v1650 = vpack.c.b16 %v1410, %v1406
    %v1651 = vpack.c.b16 %v1411, %v1407
    %v1652 = vpack.c.b16 %v1412, %v1408
    %v1653 = vpack.c.b16 %v1417, %v1413
    %v1654 = vpack.c.b16 %v1418, %v1414
    %v1655 = vpack.c.b16 %v1419, %v1415
    %v1656 = vpack.c.b16 %v1420, %v1416
    %v1657 = vpack.c.b16 %v1425, %v1421
    %v1658 = vpack.c.b16 %v1426, %v1422
    %v1659 = vpack.c.b16 %v1427, %v1423
    %v1660 = vpack.c.b16 %v1428, %v1424
    %v1661 = vpack.c.b16 %v1433, %v1429
    %v1662 = vpack.c.b16 %v1434, %v1430
    %v1663 = vpack.c.b16 %v1435, %v1431
    %v1664 = vpack.c.b16 %v1436, %v1432
    %v1665 = vpack.c.b16 %v1441, %v1437
    %v1666 = vpack.c.b16 %v1442, %v1438
    %v1667 = vpack.c.b16 %v1443, %v1439
    %v1668 = vpack.c.b16 %v1444, %v1440
    %v1669 = vpack.c.b16 %v1449, %v1445
    %v1670 = vpack.c.b16 %v1450, %v1446
    %v1671 = vpack.c.b16 %v1451, %v1447
    %v1672 = vpack.c.b16 %v1452, %v1448
    %v1673 = vpack.c.b16 %v1457, %v1453
    %v1674 = vpack.c.b16 %v1458, %v1454
    %v1675 = vpack.c.b16 %v1459, %v1455
    %v1676 = vpack.c.b16 %v1460, %v1456
    %v1677 = vpack.c.b16 %v1465, %v1461
    %v1678 = vpack.c.b16 %v1466, %v1462
    %v1679 = vpack.c.b16 %v1467, %v1463
    %v1680 = vpack.c.b16 %v1468, %v1464
    %v1681 = vpack.c.b16 %v1473, %v1469
    %v1682 = vpack.c.b16 %v1474, %v1470
    %v1683 = vpack.c.b16 %v1475, %v1471
    %v1684 = vpack.c.b16 %v1476, %v1472
    %v1685 = vpack.c.b16 %v1481, %v1477
    %v1686 = vpack.c.b16 %v1482, %v1478
    %v1687 = vpack.c.b16 %v1483, %v1479
    %v1688 = vpack.c.b16 %v1484, %v1480
    %v1689 = vpack.c.b16 %v1489, %v1485
    %v1690 = vpack.c.b16 %v1490, %v1486
    %v1691 = vpack.c.b16 %v1491, %v1487
    %v1692 = vpack.c.b16 %v1492, %v1488
    %v1693 = vpack.c.b16 %v1497, %v1493
    %v1694 = vpack.c.b16 %v1498, %v1494
    %v1695 = vpack.c.b16 %v1499, %v1495
    %v1696 = vpack.c.b16 %v1500, %v1496
    %v1697 = vpack.c.b16 %v1505, %v1501
    %v1698 = vpack.c.b16 %v1506, %v1502
    %v1699 = vpack.c.b16 %v1507, %v1503
    %v1700 = vpack.c.b16 %v1508, %v1504
    %v1701 = vpack.c.b16 %v1513, %v1509
    %v1702 = vpack.c.b16 %v1514, %v1510
    %v1703 = vpack.c.b16 %v1515, %v1511
    %v1704 = vpack.c.b16 %v1516, %v1512
    %v1705 = vpack.c.b16 %v1521, %v1517
    %v1706 = vpack.c.b16 %v1522, %v1518
    %v1707 = vpack.c.b16 %v1523, %v1519
    %v1708 = vpack.c.b16 %v1524, %v1520
    %v1709 = vpack.c.b16 %v1529, %v1525
    %v1710 = vpack.c.b16 %v1530, %v1526
    %v1711 = vpack.c.b16 %v1531, %v1527
    %v1712 = vpack.c.b16 %v1532, %v1528
    %v1713 = vpack.c.b16 %v1537, %v1533
    %v1714 = vpack.c.b16 %v1538, %v1534
    %v1715 = vpack.c.b16 %v1539, %v1535
    %v1716 = vpack.c.b16 %v1540, %v1536
    %v1717 = vpack.c.b16 %v1545, %v1541
    %v1718 = vpack.c.b16 %v1546, %v1542
    %v1719 = vpack.c.b16 %v1547, %v1543
    %v1720 = vpack.c.b16 %v1548, %v1544
    %v1721 = vpack.c.b16 %v1553, %v1549
    %v1722 = vpack.c.b16 %v1554, %v1550
    %v1723 = vpack.c.b16 %v1555, %v1551
    %v1724 = vpack.c.b16 %v1556, %v1552
    %v1725 = vpack.c.b16 %v1561, %v1557
    %v1726 = vpack.c.b16 %v1562, %v1558
    %v1727 = vpack.c.b16 %v1563, %v1559
    %v1728 = vpack.c.b16 %v1564, %v1560
    %v1729 = vpack.c.b16 %v1569, %v1565
    %v1730 = vpack.c.b16 %v1570, %v1566
    %v1731 = vpack.c.b16 %v1571, %v1567
    %v1732 = vpack.c.b16 %v1572, %v1568
    %v1733 = vpack.c.b16 %v1577, %v1573
    %v1734 = vpack.c.b16 %v1578, %v1574
    %v1735 = vpack.c.b16 %v1579, %v1575
    %v1736 = vpack.c.b16 %v1580, %v1576
    %v1737 = vpack.c.b16 %v1585, %v1581
    %v1738 = vpack.c.b16 %v1586, %v1582
    %v1739 = vpack.c.b16 %v1587, %v1583
    %v1740 = vpack.c.b16 %v1588, %v1584
    %v1741 = vpack.c.b16 %v1593, %v1589
    %v1742 = vpack.c.b16 %v1594, %v1590
    %v1743 = vpack.c.b16 %v1595, %v1591
    %v1744 = vpack.c.b16 %v1596, %v1592
    %v1745 = vpack.c.b16 %v1601, %v1597
    %v1746 = vpack.c.b16 %v1602, %v1598
    %v1747 = vpack.c.b16 %v1603, %v1599
    %v1748 = vpack.c.b16 %v1604, %v1600
    %v1749 = vpack.c.b16 %v1609, %v1605
    %v1750 = vpack.c.b16 %v1610, %v1606
    %v1751 = vpack.c.b16 %v1611, %v1607
    %v1752 = vpack.c.b16 %v1612, %v1608
    %v1753 = vpack.c.b16 %v1617, %v1613
    %v1754 = vpack.c.b16 %v1618, %v1614
    %v1755 = vpack.c.b16 %v1619, %v1615
    %v1756 = vpack.c.b16 %v1620, %v1616
    %v1757 = vpack.c.b16 %v1625, %v1621
    %v1758 = vpack.c.b16 %v1626, %v1622
    %v1759 = vpack.c.b16 %v1627, %v1623
    %v1760 = vpack.c.b16 %v1628, %v1624
    %v1761 = vpack.c.b16 %v1633, %v1629
    %v1762 = vpack.c.b16 %v1634, %v1630
    %v1763 = vpack.c.b16 %v1635, %v1631
    %v1764 = vpack.c.b16 %v1636, %v1632
    %1893 = vmatprep.subr.bf16.mxu0 %v1638
    %1894 = vmatpush1.bf16.msra.mxu0 %v1637
    %1895 = vmatprep.subr.bf16.mxu0 %v1642
    %1896 = vmatpush1.bf16.msra.mxu0 %v1641
    %1897 = vmatprep.subr.bf16.mxu0 %v1646
    %1898 = vmatpush1.bf16.msra.mxu0 %v1645
    %1899 = vmatprep.subr.bf16.mxu0 %v1650
    %1900 = vmatpush1.bf16.msra.mxu0 %v1649
    %1901 = vmatprep.subr.bf16.mxu0 %v1654
    %1902 = vmatpush1.bf16.msra.mxu0 %v1653
    %1903 = vmatprep.subr.bf16.mxu0 %v1658
    %1904 = vmatpush1.bf16.msra.mxu0 %v1657
    %1905 = vmatprep.subr.bf16.mxu0 %v1662
    %1906 = vmatpush1.bf16.msra.mxu0 %v1661
    %1907 = vmatprep.subr.bf16.mxu0 %v1666
    %1908 = vmatpush1.bf16.msra.mxu0 %v1665
    %1909 = vmatprep.subr.bf16.mxu0 %v1670
    %1910 = vmatpush1.bf16.msra.mxu0 %v1669
    %1911 = vmatprep.subr.bf16.mxu0 %v1674
    %1912 = vmatpush1.bf16.msra.mxu0 %v1673
    %1913 = vmatprep.subr.bf16.mxu0 %v1678
    %1914 = vmatpush1.bf16.msra.mxu0 %v1677
    %1915 = vmatprep.subr.bf16.mxu0 %v1682
    %1916 = vmatpush1.bf16.msra.mxu0 %v1681
    %1917 = vmatprep.subr.bf16.mxu0 %v1686
    %1918 = vmatpush1.bf16.msra.mxu0 %v1685
    %1919 = vmatprep.subr.bf16.mxu0 %v1690
    %1920 = vmatpush1.bf16.msra.mxu0 %v1689
    %1921 = vmatprep.subr.bf16.mxu0 %v1694
    %1922 = vmatpush1.bf16.msra.mxu0 %v1693
    %1923 = vmatprep.subr.bf16.mxu0 %v1698
    %1924 = vmatpush1.bf16.msra.mxu0 %v1697
    %1925 = vmatprep.mubr.bf16.mxu0 %v1246
    %1926 = vmatmul.mubr.bf16.gmra.mrb[0].mxu0 %v1245
    %v1927 = vpop.f32.mrb[0].mxu0
    %v1928 = vadd.f32 %v1207, %v1927
    %v1929 = vpop.f32.mrb[0].mxu0
    %v1930 = vadd.f32 %v1211, %v1929
    %v1931 = vpop.f32.mrb[0].mxu0
    %v1932 = vpop.f32.mrb[0].mxu0
    %1933 = vdwg.mxu0
    %1934 = vmatprep.subr.bf16.mxu0 %v1702
    %1935 = vmatpush1.bf16.msra.mxu0 %v1701
    %1936 = vmatprep.subr.bf16.mxu0 %v1706
    %1937 = vmatpush1.bf16.msra.mxu0 %v1705
    %1938 = vmatprep.subr.bf16.mxu0 %v1710
    %1939 = vmatpush1.bf16.msra.mxu0 %v1709
    %1940 = vmatprep.subr.bf16.mxu0 %v1714
    %1941 = vmatpush1.bf16.msra.mxu0 %v1713
    %1942 = vmatprep.subr.bf16.mxu0 %v1718
    %1943 = vmatpush1.bf16.msra.mxu0 %v1717
    %1944 = vmatprep.subr.bf16.mxu0 %v1722
    %1945 = vmatpush1.bf16.msra.mxu0 %v1721
    %1946 = vmatprep.subr.bf16.mxu0 %v1726
    %1947 = vmatpush1.bf16.msra.mxu0 %v1725
    %1948 = vmatprep.subr.bf16.mxu0 %v1730
    %1949 = vmatpush1.bf16.msra.mxu0 %v1729
    %1950 = vmatprep.subr.bf16.mxu0 %v1734
    %1951 = vmatpush1.bf16.msra.mxu0 %v1733
    %1952 = vmatprep.subr.bf16.mxu0 %v1738
    %1953 = vmatpush1.bf16.msra.mxu0 %v1737
    %1954 = vmatprep.subr.bf16.mxu0 %v1742
    %1955 = vmatpush1.bf16.msra.mxu0 %v1741
    %1956 = vmatprep.subr.bf16.mxu0 %v1746
    %1957 = vmatpush1.bf16.msra.mxu0 %v1745
    %1958 = vmatprep.subr.bf16.mxu0 %v1750
    %1959 = vmatpush1.bf16.msra.mxu0 %v1749
    %1960 = vmatprep.subr.bf16.mxu0 %v1754
    %1961 = vmatpush1.bf16.msra.mxu0 %v1753
    %1962 = vmatprep.subr.bf16.mxu0 %v1758
    %1963 = vmatpush1.bf16.msra.mxu0 %v1757
    %1964 = vmatprep.subr.bf16.mxu0 %v1762
    %1965 = vmatpush1.bf16.msra.mxu0 %v1761
    %1966 = vmatprep.mubr.bf16.mxu0 %v1248
    %1967 = vmatmul.mubr.bf16.gmra.mrb[0].mxu0 %v1247
    %v1968 = vpop.f32.mrb[0].mxu0
    %v1969 = vadd.f32 %v1928, %v1968
    %v1970 = vpop.f32.mrb[0].mxu0
    %v1971 = vadd.f32 %v1930, %v1970
    %v1972 = vpop.f32.mrb[0].mxu0
    %v1973 = vpop.f32.mrb[0].mxu0
    %1974 = vdwg.mxu0
    %1975 = vmatprep.subr.bf16.mxu0 %v1640
    %1976 = vmatpush1.bf16.msra.mxu0 %v1639
    %1977 = vmatprep.subr.bf16.mxu0 %v1644
    %1978 = vmatpush1.bf16.msra.mxu0 %v1643
    %1979 = vmatprep.subr.bf16.mxu0 %v1648
    %1980 = vmatpush1.bf16.msra.mxu0 %v1647
    %1981 = vmatprep.subr.bf16.mxu0 %v1652
    %1982 = vmatpush1.bf16.msra.mxu0 %v1651
    %1983 = vmatprep.subr.bf16.mxu0 %v1656
    %1984 = vmatpush1.bf16.msra.mxu0 %v1655
    %1985 = vmatprep.subr.bf16.mxu0 %v1660
    %1986 = vmatpush1.bf16.msra.mxu0 %v1659
    %1987 = vmatprep.subr.bf16.mxu0 %v1664
    %1988 = vmatpush1.bf16.msra.mxu0 %v1663
    %1989 = vmatprep.subr.bf16.mxu0 %v1668
    %1990 = vmatpush1.bf16.msra.mxu0 %v1667
    %1991 = vmatprep.subr.bf16.mxu0 %v1672
    %1992 = vmatpush1.bf16.msra.mxu0 %v1671
    %1993 = vmatprep.subr.bf16.mxu0 %v1676
    %1994 = vmatpush1.bf16.msra.mxu0 %v1675
    %1995 = vmatprep.subr.bf16.mxu0 %v1680
    %1996 = vmatpush1.bf16.msra.mxu0 %v1679
    %1997 = vmatprep.subr.bf16.mxu0 %v1684
    %1998 = vmatpush1.bf16.msra.mxu0 %v1683
    %1999 = vmatprep.subr.bf16.mxu0 %v1688
    %2000 = vmatpush1.bf16.msra.mxu0 %v1687
    %2001 = vmatprep.subr.bf16.mxu0 %v1692
    %2002 = vmatpush1.bf16.msra.mxu0 %v1691
    %2003 = vmatprep.subr.bf16.mxu0 %v1696
    %2004 = vmatpush1.bf16.msra.mxu0 %v1695
    %2005 = vmatprep.subr.bf16.mxu0 %v1700
    %2006 = vmatpush1.bf16.msra.mxu0 %v1699
    %2007 = vmatprep.mubr.bf16.mxu0 %v1246
    %2008 = vmatmul.mubr.bf16.gmra.mrb[0].mxu0 %v1245
    %v2009 = vpop.f32.mrb[0].mxu0
    %v2010 = vadd.f32 %v1215, %v2009
    %v2011 = vpop.f32.mrb[0].mxu0
    %v2012 = vadd.f32 %v1219, %v2011
    %v2013 = vpop.f32.mrb[0].mxu0
    %v2014 = vpop.f32.mrb[0].mxu0
    %2015 = vdwg.mxu0
    %2016 = vmatprep.subr.bf16.mxu0 %v1704
    %2017 = vmatpush1.bf16.msra.mxu0 %v1703
    %2018 = vmatprep.subr.bf16.mxu0 %v1708
    %2019 = vmatpush1.bf16.msra.mxu0 %v1707
    %2020 = vmatprep.subr.bf16.mxu0 %v1712
    %2021 = vmatpush1.bf16.msra.mxu0 %v1711
    %2022 = vmatprep.subr.bf16.mxu0 %v1716
    %2023 = vmatpush1.bf16.msra.mxu0 %v1715
    %2024 = vmatprep.subr.bf16.mxu0 %v1720
    %2025 = vmatpush1.bf16.msra.mxu0 %v1719
    %2026 = vmatprep.subr.bf16.mxu0 %v1724
    %2027 = vmatpush1.bf16.msra.mxu0 %v1723
    %2028 = vmatprep.subr.bf16.mxu0 %v1728
    %2029 = vmatpush1.bf16.msra.mxu0 %v1727
    %2030 = vmatprep.subr.bf16.mxu0 %v1732
    %2031 = vmatpush1.bf16.msra.mxu0 %v1731
    %2032 = vmatprep.subr.bf16.mxu0 %v1736
    %2033 = vmatpush1.bf16.msra.mxu0 %v1735
    %2034 = vmatprep.subr.bf16.mxu0 %v1740
    %2035 = vmatpush1.bf16.msra.mxu0 %v1739
    %2036 = vmatprep.subr.bf16.mxu0 %v1744
    %2037 = vmatpush1.bf16.msra.mxu0 %v1743
    %2038 = vmatprep.subr.bf16.mxu0 %v1748
    %2039 = vmatpush1.bf16.msra.mxu0 %v1747
    %2040 = vmatprep.subr.bf16.mxu0 %v1752
    %2041 = vmatpush1.bf16.msra.mxu0 %v1751
    %2042 = vmatprep.subr.bf16.mxu0 %v1756
    %2043 = vmatpush1.bf16.msra.mxu0 %v1755
    %2044 = vmatprep.subr.bf16.mxu0 %v1760
    %2045 = vmatpush1.bf16.msra.mxu0 %v1759
    %2046 = vmatprep.subr.bf16.mxu0 %v1764
    %2047 = vmatpush1.bf16.msra.mxu0 %v1763
    %2048 = vmatprep.mubr.bf16.mxu0 %v1248
    %2049 = vmatmul.mubr.bf16.gmra.mrb[0].mxu0 %v1247
    %v2050 = vpop.f32.mrb[0].mxu0
    %v2051 = vadd.f32 %v2010, %v2050
    %v2052 = vpop.f32.mrb[0].mxu0
    %v2053 = vadd.f32 %v2012, %v2052
    %v2054 = vpop.f32.mrb[0].mxu0
    %v2055 = vpop.f32.mrb[0].mxu0
    %2056 = vdwg.mxu0
    %v2057 = vmax.f32 %v1969, 0.0
    %v2058 = vmax.f32 %v1971, 0.0
    %v2059 = vmax.f32 %v2051, 0.0
    %v2060 = vmax.f32 %v2053, 0.0
    %v2061 = vpack.c.bf16 %v2057, %v2057
    %v2062 = vpack.c.bf16 %v2058, %v2058
    %v2063 = vpack.c.bf16 %v2059, %v2059
    %v2064 = vpack.c.bf16 %v2060, %v2060
    %v2065 = vld [vmem:[#allocation7 + $0x10] sm:$0xff]
    %v2066 = vld [vmem:[#allocation7 + $0x28] sm:$0xff]
    %v2067 = vld [vmem:[#allocation7 + $0x40] sm:$0xff]
    %v2068 = vld [vmem:[#allocation7 + $0x58] sm:$0xff]
    %v2069 = vld [vmem:[#allocation7 + $0x70] sm:$0xff]
    %v2070 = vld [vmem:[#allocation7 + $0x88] sm:$0xff]
    %v2071 = vld [vmem:[#allocation7 + $0xa0] sm:$0xff]
    %v2072 = vld [vmem:[#allocation7 + $0xb8] sm:$0xff]
    %v2073 = vld [vmem:[#allocation7 + $0xd0] sm:$0xff]
    %v2074 = vld [vmem:[#allocation7 + $0xe8] sm:$0xff]
    %v2075 = vld [vmem:[#allocation7 + $0x100] sm:$0xff]
    %v2076 = vld [vmem:[#allocation7 + $0x118] sm:$0xff]
    %v2077 = vld [vmem:[#allocation7 + $0x130] sm:$0xff]
    %v2078 = vld [vmem:[#allocation7 + $0x148] sm:$0xff]
    %v2079 = vld [vmem:[#allocation7 + $0x160] sm:$0xff]
    %v2080 = vld [vmem:[#allocation7 + $0x178] sm:$0xff]
    %v2081 = vld [vmem:[#allocation7 + $0x190] sm:$0xff]
    %v2082 = vld [vmem:[#allocation7 + $0x1a8] sm:$0xff]
    %v2083 = vld [vmem:[#allocation7 + $0x1c0] sm:$0xff]
    %v2084 = vld [vmem:[#allocation7 + $0x1d8] sm:$0xff]
    %v2085 = vld [vmem:[#allocation7 + $0x1f0] sm:$0xff]
    %v2086 = vld [vmem:[#allocation7 + $0x208] sm:$0xff]
    %v2087 = vld [vmem:[#allocation7 + $0x220] sm:$0xff]
    %v2088 = vld [vmem:[#allocation7 + $0x238] sm:$0xff]
    %v2089 = vld [vmem:[#allocation7 + $0x250] sm:$0xff]
    %v2090 = vld [vmem:[#allocation7 + $0x268] sm:$0xff]
    %v2091 = vld [vmem:[#allocation7 + $0x280] sm:$0xff]
    %v2092 = vld [vmem:[#allocation7 + $0x298] sm:$0xff]
    %v2093 = vld [vmem:[#allocation7 + $0x2b0] sm:$0xff]
    %v2094 = vld [vmem:[#allocation7 + $0x2c8] sm:$0xff]
    %v2095 = vld [vmem:[#allocation7 + $0x2e0] sm:$0xff]
    %v2096 = vld [vmem:[#allocation7 + $0x2f8] sm:$0xff]
    %v2097 = vld [vmem:[#allocation7 + $0x310] sm:$0xff]
    %v2098 = vld [vmem:[#allocation7 + $0x328] sm:$0xff]
    %v2099 = vld [vmem:[#allocation7 + $0x340] sm:$0xff]
    %v2100 = vld [vmem:[#allocation7 + $0x358] sm:$0xff]
    %v2101 = vld [vmem:[#allocation7 + $0x370] sm:$0xff]
    %v2102 = vld [vmem:[#allocation7 + $0x388] sm:$0xff]
    %v2103 = vld [vmem:[#allocation7 + $0x3a0] sm:$0xff]
    %v2104 = vld [vmem:[#allocation7 + $0x3b8] sm:$0xff]
    %v2105 = vld [vmem:[#allocation7 + $0x3d0] sm:$0xff]
    %v2106 = vld [vmem:[#allocation7 + $0x3e8] sm:$0xff]
    %v2107 = vld [vmem:[#allocation7 + $0x400] sm:$0xff]
    %v2108 = vld [vmem:[#allocation7 + $0x418] sm:$0xff]
    %v2109 = vld [vmem:[#allocation7 + $0x430] sm:$0xff]
    %v2110 = vld [vmem:[#allocation7 + $0x448] sm:$0xff]
    %v2111 = vld [vmem:[#allocation7 + $0x460] sm:$0xff]
    %v2112 = vld [vmem:[#allocation7 + $0x478] sm:$0xff]
    %v2113 = vld [vmem:[#allocation7 + $0x490] sm:$0xff]
    %v2114 = vld [vmem:[#allocation7 + $0x4a8] sm:$0xff]
    %v2115 = vld [vmem:[#allocation7 + $0x4c0] sm:$0xff]
    %v2116 = vld [vmem:[#allocation7 + $0x4d8] sm:$0xff]
    %v2117 = vld [vmem:[#allocation7 + $0x4f0] sm:$0xff]
    %v2118 = vld [vmem:[#allocation7 + $0x508] sm:$0xff]
    %v2119 = vld [vmem:[#allocation7 + $0x520] sm:$0xff]
    %v2120 = vld [vmem:[#allocation7 + $0x538] sm:$0xff]
    %v2121 = vld [vmem:[#allocation7 + $0x550] sm:$0xff]
    %v2122 = vld [vmem:[#allocation7 + $0x568] sm:$0xff]
    %v2123 = vld [vmem:[#allocation7 + $0x580] sm:$0xff]
    %v2124 = vld [vmem:[#allocation7 + $0x598] sm:$0xff]
    %v2125 = vld [vmem:[#allocation7 + $0x5b0] sm:$0xff]
    %v2126 = vld [vmem:[#allocation7 + $0x5c8] sm:$0xff]
    %v2127 = vld [vmem:[#allocation7 + $0x5e0] sm:$0xff]
    %v2128 = vld [vmem:[#allocation7 + $0x5f8] sm:$0xff]
    %v2130 = vlaneseq
    %v2131 = vshrl.u32 %v2130, 7
    %v2132 = vsub.s32 0, %v2131
    %v2133 = vrot.slane %v71, %v2132
    %v2134 = vlaneseq
    %v2135 = vshrl.u32 %v2134, 7
    %v2136 = vsub.s32 1, %v2135
    %v2137 = vrot.slane %v71, %v2136
    %v2204 = vunpack.c.l.b16 %v2065
    %v2205 = vunpack.c.h.b16 %v2065
    %v2206 = vunpack.c.l.b16 %v2066
    %v2207 = vunpack.c.h.b16 %v2066
    %v2208 = vunpack.c.l.b16 %v2067
    %v2209 = vunpack.c.h.b16 %v2067
    %v2210 = vunpack.c.l.b16 %v2068
    %v2211 = vunpack.c.h.b16 %v2068
    %v2212 = vunpack.c.l.b16 %v2069
    %v2213 = vunpack.c.h.b16 %v2069
    %v2214 = vunpack.c.l.b16 %v2070
    %v2215 = vunpack.c.h.b16 %v2070
    %v2216 = vunpack.c.l.b16 %v2071
    %v2217 = vunpack.c.h.b16 %v2071
    %v2218 = vunpack.c.l.b16 %v2072
    %v2219 = vunpack.c.h.b16 %v2072
    %v2220 = vunpack.c.l.b16 %v2073
    %v2221 = vunpack.c.h.b16 %v2073
    %v2222 = vunpack.c.l.b16 %v2074
    %v2223 = vunpack.c.h.b16 %v2074
    %v2224 = vunpack.c.l.b16 %v2075
    %v2225 = vunpack.c.h.b16 %v2075
    %v2226 = vunpack.c.l.b16 %v2076
    %v2227 = vunpack.c.h.b16 %v2076
    %v2228 = vunpack.c.l.b16 %v2077
    %v2229 = vunpack.c.h.b16 %v2077
    %v2230 = vunpack.c.l.b16 %v2078
    %v2231 = vunpack.c.h.b16 %v2078
    %v2232 = vunpack.c.l.b16 %v2079
    %v2233 = vunpack.c.h.b16 %v2079
    %v2234 = vunpack.c.l.b16 %v2080
    %v2235 = vunpack.c.h.b16 %v2080
    %v2236 = vunpack.c.l.b16 %v2081
    %v2237 = vunpack.c.h.b16 %v2081
    %v2238 = vunpack.c.l.b16 %v2082
    %v2239 = vunpack.c.h.b16 %v2082
    %v2240 = vunpack.c.l.b16 %v2083
    %v2241 = vunpack.c.h.b16 %v2083
    %v2242 = vunpack.c.l.b16 %v2084
    %v2243 = vunpack.c.h.b16 %v2084
    %v2244 = vunpack.c.l.b16 %v2085
    %v2245 = vunpack.c.h.b16 %v2085
    %v2246 = vunpack.c.l.b16 %v2086
    %v2247 = vunpack.c.h.b16 %v2086
    %v2248 = vunpack.c.l.b16 %v2087
    %v2249 = vunpack.c.h.b16 %v2087
    %v2250 = vunpack.c.l.b16 %v2088
    %v2251 = vunpack.c.h.b16 %v2088
    %v2252 = vunpack.c.l.b16 %v2089
    %v2253 = vunpack.c.h.b16 %v2089
    %v2254 = vunpack.c.l.b16 %v2090
    %v2255 = vunpack.c.h.b16 %v2090
    %v2256 = vunpack.c.l.b16 %v2091
    %v2257 = vunpack.c.h.b16 %v2091
    %v2258 = vunpack.c.l.b16 %v2092
    %v2259 = vunpack.c.h.b16 %v2092
    %v2260 = vunpack.c.l.b16 %v2093
    %v2261 = vunpack.c.h.b16 %v2093
    %v2262 = vunpack.c.l.b16 %v2094
    %v2263 = vunpack.c.h.b16 %v2094
    %v2264 = vunpack.c.l.b16 %v2095
    %v2265 = vunpack.c.h.b16 %v2095
    %v2266 = vunpack.c.l.b16 %v2096
    %v2267 = vunpack.c.h.b16 %v2096
    %v2268 = vunpack.c.l.b16 %v2097
    %v2269 = vunpack.c.h.b16 %v2097
    %v2270 = vunpack.c.l.b16 %v2098
    %v2271 = vunpack.c.h.b16 %v2098
    %v2272 = vunpack.c.l.b16 %v2099
    %v2273 = vunpack.c.h.b16 %v2099
    %v2274 = vunpack.c.l.b16 %v2100
    %v2275 = vunpack.c.h.b16 %v2100
    %v2276 = vunpack.c.l.b16 %v2101
    %v2277 = vunpack.c.h.b16 %v2101
    %v2278 = vunpack.c.l.b16 %v2102
    %v2279 = vunpack.c.h.b16 %v2102
    %v2280 = vunpack.c.l.b16 %v2103
    %v2281 = vunpack.c.h.b16 %v2103
    %v2282 = vunpack.c.l.b16 %v2104
    %v2283 = vunpack.c.h.b16 %v2104
    %v2284 = vunpack.c.l.b16 %v2105
    %v2285 = vunpack.c.h.b16 %v2105
    %v2286 = vunpack.c.l.b16 %v2106
    %v2287 = vunpack.c.h.b16 %v2106
    %v2288 = vunpack.c.l.b16 %v2107
    %v2289 = vunpack.c.h.b16 %v2107
    %v2290 = vunpack.c.l.b16 %v2108
    %v2291 = vunpack.c.h.b16 %v2108
    %v2292 = vunpack.c.l.b16 %v2109
    %v2293 = vunpack.c.h.b16 %v2109
    %v2294 = vunpack.c.l.b16 %v2110
    %v2295 = vunpack.c.h.b16 %v2110
    %v2296 = vunpack.c.l.b16 %v2111
    %v2297 = vunpack.c.h.b16 %v2111
    %v2298 = vunpack.c.l.b16 %v2112
    %v2299 = vunpack.c.h.b16 %v2112
    %v2300 = vunpack.c.l.b16 %v2113
    %v2301 = vunpack.c.h.b16 %v2113
    %v2302 = vunpack.c.l.b16 %v2114
    %v2303 = vunpack.c.h.b16 %v2114
    %v2304 = vunpack.c.l.b16 %v2115
    %v2305 = vunpack.c.h.b16 %v2115
    %v2306 = vunpack.c.l.b16 %v2116
    %v2307 = vunpack.c.h.b16 %v2116
    %v2308 = vunpack.c.l.b16 %v2117
    %v2309 = vunpack.c.h.b16 %v2117
    %v2310 = vunpack.c.l.b16 %v2118
    %v2311 = vunpack.c.h.b16 %v2118
    %v2312 = vunpack.c.l.b16 %v2119
    %v2313 = vunpack.c.h.b16 %v2119
    %v2314 = vunpack.c.l.b16 %v2120
    %v2315 = vunpack.c.h.b16 %v2120
    %v2316 = vunpack.c.l.b16 %v2121
    %v2317 = vunpack.c.h.b16 %v2121
    %v2318 = vunpack.c.l.b16 %v2122
    %v2319 = vunpack.c.h.b16 %v2122
    %v2320 = vunpack.c.l.b16 %v2123
    %v2321 = vunpack.c.h.b16 %v2123
    %v2322 = vunpack.c.l.b16 %v2124
    %v2323 = vunpack.c.h.b16 %v2124
    %v2324 = vunpack.c.l.b16 %v2125
    %v2325 = vunpack.c.h.b16 %v2125
    %v2326 = vunpack.c.l.b16 %v2126
    %v2327 = vunpack.c.h.b16 %v2126
    %v2328 = vunpack.c.l.b16 %v2127
    %v2329 = vunpack.c.h.b16 %v2127
    %v2330 = vunpack.c.l.b16 %v2128
    %v2331 = vunpack.c.h.b16 %v2128
    %v2332 = vpack.c.b16 %v2206, %v2204
    %v2333 = vpack.c.b16 %v2207, %v2205
    %v2334 = vpack.c.b16 %v2210, %v2208
    %v2335 = vpack.c.b16 %v2211, %v2209
    %v2336 = vpack.c.b16 %v2214, %v2212
    %v2337 = vpack.c.b16 %v2215, %v2213
    %v2338 = vpack.c.b16 %v2218, %v2216
    %v2339 = vpack.c.b16 %v2219, %v2217
    %v2340 = vpack.c.b16 %v2222, %v2220
    %v2341 = vpack.c.b16 %v2223, %v2221
    %v2342 = vpack.c.b16 %v2226, %v2224
    %v2343 = vpack.c.b16 %v2227, %v2225
    %v2344 = vpack.c.b16 %v2230, %v2228
    %v2345 = vpack.c.b16 %v2231, %v2229
    %v2346 = vpack.c.b16 %v2234, %v2232
    %v2347 = vpack.c.b16 %v2235, %v2233
    %v2348 = vpack.c.b16 %v2238, %v2236
    %v2349 = vpack.c.b16 %v2239, %v2237
    %v2350 = vpack.c.b16 %v2242, %v2240
    %v2351 = vpack.c.b16 %v2243, %v2241
    %v2352 = vpack.c.b16 %v2246, %v2244
    %v2353 = vpack.c.b16 %v2247, %v2245
    %v2354 = vpack.c.b16 %v2250, %v2248
    %v2355 = vpack.c.b16 %v2251, %v2249
    %v2356 = vpack.c.b16 %v2254, %v2252
    %v2357 = vpack.c.b16 %v2255, %v2253
    %v2358 = vpack.c.b16 %v2258, %v2256
    %v2359 = vpack.c.b16 %v2259, %v2257
    %v2360 = vpack.c.b16 %v2262, %v2260
    %v2361 = vpack.c.b16 %v2263, %v2261
    %v2362 = vpack.c.b16 %v2266, %v2264
    %v2363 = vpack.c.b16 %v2267, %v2265
    %v2364 = vpack.c.b16 %v2270, %v2268
    %v2365 = vpack.c.b16 %v2271, %v2269
    %v2366 = vpack.c.b16 %v2274, %v2272
    %v2367 = vpack.c.b16 %v2275, %v2273
    %v2368 = vpack.c.b16 %v2278, %v2276
    %v2369 = vpack.c.b16 %v2279, %v2277
    %v2370 = vpack.c.b16 %v2282, %v2280
    %v2371 = vpack.c.b16 %v2283, %v2281
    %v2372 = vpack.c.b16 %v2286, %v2284
    %v2373 = vpack.c.b16 %v2287, %v2285
    %v2374 = vpack.c.b16 %v2290, %v2288
    %v2375 = vpack.c.b16 %v2291, %v2289
    %v2376 = vpack.c.b16 %v2294, %v2292
    %v2377 = vpack.c.b16 %v2295, %v2293
    %v2378 = vpack.c.b16 %v2298, %v2296
    %v2379 = vpack.c.b16 %v2299, %v2297
    %v2380 = vpack.c.b16 %v2302, %v2300
    %v2381 = vpack.c.b16 %v2303, %v2301
    %v2382 = vpack.c.b16 %v2306, %v2304
    %v2383 = vpack.c.b16 %v2307, %v2305
    %v2384 = vpack.c.b16 %v2310, %v2308
    %v2385 = vpack.c.b16 %v2311, %v2309
    %v2386 = vpack.c.b16 %v2314, %v2312
    %v2387 = vpack.c.b16 %v2315, %v2313
    %v2388 = vpack.c.b16 %v2318, %v2316
    %v2389 = vpack.c.b16 %v2319, %v2317
    %v2390 = vpack.c.b16 %v2322, %v2320
    %v2391 = vpack.c.b16 %v2323, %v2321
    %v2392 = vpack.c.b16 %v2326, %v2324
    %v2393 = vpack.c.b16 %v2327, %v2325
    %v2394 = vpack.c.b16 %v2330, %v2328
    %v2395 = vpack.c.b16 %v2331, %v2329
    %2460 = vmatprep.subr.bf16.mxu0 %v2333
    %2461 = vmatpush1.bf16.msra.mxu0 %v2332
    %2462 = vmatprep.subr.bf16.mxu0 %v2335
    %2463 = vmatpush1.bf16.msra.mxu0 %v2334
    %2464 = vmatprep.subr.bf16.mxu0 %v2337
    %2465 = vmatpush1.bf16.msra.mxu0 %v2336
    %2466 = vmatprep.subr.bf16.mxu0 %v2339
    %2467 = vmatpush1.bf16.msra.mxu0 %v2338
    %2468 = vmatprep.subr.bf16.mxu0 %v2341
    %2469 = vmatpush1.bf16.msra.mxu0 %v2340
    %2470 = vmatprep.subr.bf16.mxu0 %v2343
    %2471 = vmatpush1.bf16.msra.mxu0 %v2342
    %2472 = vmatprep.subr.bf16.mxu0 %v2345
    %2473 = vmatpush1.bf16.msra.mxu0 %v2344
    %2474 = vmatprep.subr.bf16.mxu0 %v2347
    %2475 = vmatpush1.bf16.msra.mxu0 %v2346
    %2476 = vmatprep.subr.bf16.mxu0 %v2349
    %2477 = vmatpush1.bf16.msra.mxu0 %v2348
    %2478 = vmatprep.subr.bf16.mxu0 %v2351
    %2479 = vmatpush1.bf16.msra.mxu0 %v2350
    %2480 = vmatprep.subr.bf16.mxu0 %v2353
    %2481 = vmatpush1.bf16.msra.mxu0 %v2352
    %2482 = vmatprep.subr.bf16.mxu0 %v2355
    %2483 = vmatpush1.bf16.msra.mxu0 %v2354
    %2484 = vmatprep.subr.bf16.mxu0 %v2357
    %2485 = vmatpush1.bf16.msra.mxu0 %v2356
    %2486 = vmatprep.subr.bf16.mxu0 %v2359
    %2487 = vmatpush1.bf16.msra.mxu0 %v2358
    %2488 = vmatprep.subr.bf16.mxu0 %v2361
    %2489 = vmatpush1.bf16.msra.mxu0 %v2360
    %2490 = vmatprep.subr.bf16.mxu0 %v2363
    %2491 = vmatpush1.bf16.msra.mxu0 %v2362
    %2492 = vmatprep.mubr.bf16.mxu0 %v2062
    %2493 = vmatmul.mubr.bf16.gmra.mrb[0].mxu0 %v2061
    %v2494 = vpop.f32.mrb[0].mxu0
    %v2495 = vadd.f32 %v2133, %v2494
    %v2496 = vpop.f32.mrb[0].mxu0
    %v2497 = vadd.f32 %v2137, %v2496
    %v2498 = vpop.f32.mrb[0].mxu0
    %v2499 = vpop.f32.mrb[0].mxu0
    %2500 = vdwg.mxu0
    %2501 = vmatprep.subr.bf16.mxu0 %v2365
    %2502 = vmatpush1.bf16.msra.mxu0 %v2364
    %2503 = vmatprep.subr.bf16.mxu0 %v2367
    %2504 = vmatpush1.bf16.msra.mxu0 %v2366
    %2505 = vmatprep.subr.bf16.mxu0 %v2369
    %2506 = vmatpush1.bf16.msra.mxu0 %v2368
    %2507 = vmatprep.subr.bf16.mxu0 %v2371
    %2508 = vmatpush1.bf16.msra.mxu0 %v2370
    %2509 = vmatprep.subr.bf16.mxu0 %v2373
    %2510 = vmatpush1.bf16.msra.mxu0 %v2372
    %2511 = vmatprep.subr.bf16.mxu0 %v2375
    %2512 = vmatpush1.bf16.msra.mxu0 %v2374
    %2513 = vmatprep.subr.bf16.mxu0 %v2377
    %2514 = vmatpush1.bf16.msra.mxu0 %v2376
    %2515 = vmatprep.subr.bf16.mxu0 %v2379
    %2516 = vmatpush1.bf16.msra.mxu0 %v2378
    %2517 = vmatprep.subr.bf16.mxu0 %v2381
    %2518 = vmatpush1.bf16.msra.mxu0 %v2380
    %2519 = vmatprep.subr.bf16.mxu0 %v2383
    %2520 = vmatpush1.bf16.msra.mxu0 %v2382
    %2521 = vmatprep.subr.bf16.mxu0 %v2385
    %2522 = vmatpush1.bf16.msra.mxu0 %v2384
    %2523 = vmatprep.subr.bf16.mxu0 %v2387
    %2524 = vmatpush1.bf16.msra.mxu0 %v2386
    %2525 = vmatprep.subr.bf16.mxu0 %v2389
    %2526 = vmatpush1.bf16.msra.mxu0 %v2388
    %2527 = vmatprep.subr.bf16.mxu0 %v2391
    %2528 = vmatpush1.bf16.msra.mxu0 %v2390
    %2529 = vmatprep.subr.bf16.mxu0 %v2393
    %2530 = vmatpush1.bf16.msra.mxu0 %v2392
    %2531 = vmatprep.subr.bf16.mxu0 %v2395
    %2532 = vmatpush1.bf16.msra.mxu0 %v2394
    %2533 = vmatprep.mubr.bf16.mxu0 %v2064
    %2534 = vmatmul.mubr.bf16.gmra.mrb[0].mxu0 %v2063
    %v2535 = vpop.f32.mrb[0].mxu0
    %v2536 = vadd.f32 %v2495, %v2535
    %v2537 = vpop.f32.mrb[0].mxu0
    %v2538 = vadd.f32 %v2497, %v2537
    %v2539 = vpop.f32.mrb[0].mxu0
    %v2540 = vpop.f32.mrb[0].mxu0
    %2541 = vdwg.mxu0
    %v2542 = vmax.f32 %v2536, 0.0
    %v2543 = vmax.f32 %v2538, 0.0
    %v2544 = vpack.c.bf16 %v2542, %v2542
    %v2545 = vpack.c.bf16 %v2543, %v2543
    %v2546 = vld [vmem:[#allocation5 + $0x10] sm:$0xf]
    %v2547 = vld [vmem:[#allocation5 + $0x24] sm:$0xf]
    %v2548 = vld [vmem:[#allocation5 + $0x38] sm:$0xf]
    %v2549 = vld [vmem:[#allocation5 + $0x4c] sm:$0xf]
    %v2550 = vld [vmem:[#allocation5 + $0x60] sm:$0xf]
    %v2551 = vld [vmem:[#allocation5 + $0x74] sm:$0xf]
    %v2552 = vld [vmem:[#allocation5 + $0x88] sm:$0xf]
    %v2553 = vld [vmem:[#allocation5 + $0x9c] sm:$0xf]
    %v2554 = vld [vmem:[#allocation5 + $0xb0] sm:$0xf]
    %v2555 = vld [vmem:[#allocation5 + $0xc4] sm:$0xf]
    %v2556 = vld [vmem:[#allocation5 + $0xd8] sm:$0xf]
    %v2557 = vld [vmem:[#allocation5 + $0xec] sm:$0xf]
    %v2558 = vld [vmem:[#allocation5 + $0x100] sm:$0xf]
    %v2559 = vld [vmem:[#allocation5 + $0x114] sm:$0xf]
    %v2560 = vld [vmem:[#allocation5 + $0x128] sm:$0xf]
    %v2561 = vld [vmem:[#allocation5 + $0x13c] sm:$0xf]
    %v2562 = vld [vmem:[#allocation5 + $0x150] sm:$0xf]
    %v2563 = vld [vmem:[#allocation5 + $0x164] sm:$0xf]
    %v2564 = vld [vmem:[#allocation5 + $0x178] sm:$0xf]
    %v2565 = vld [vmem:[#allocation5 + $0x18c] sm:$0xf]
    %v2566 = vld [vmem:[#allocation5 + $0x1a0] sm:$0xf]
    %v2567 = vld [vmem:[#allocation5 + $0x1b4] sm:$0xf]
    %v2568 = vld [vmem:[#allocation5 + $0x1c8] sm:$0xf]
    %v2569 = vld [vmem:[#allocation5 + $0x1dc] sm:$0xf]
    %v2570 = vld [vmem:[#allocation5 + $0x1f0] sm:$0xf]
    %v2571 = vld [vmem:[#allocation5 + $0x204] sm:$0xf]
    %v2572 = vld [vmem:[#allocation5 + $0x218] sm:$0xf]
    %v2573 = vld [vmem:[#allocation5 + $0x22c] sm:$0xf]
    %v2574 = vld [vmem:[#allocation5 + $0x240] sm:$0xf]
    %v2575 = vld [vmem:[#allocation5 + $0x254] sm:$0xf]
    %v2576 = vld [vmem:[#allocation5 + $0x268] sm:$0xf]
    %v2577 = vld [vmem:[#allocation5 + $0x27c] sm:$0xf]
    %v2579 = vlaneseq
    %v2580 = vshrl.u32 %v2579, 7
    %v2581 = vsub.s32 0, %v2580
    %v2582 = vrot.slane %v72, %v2581
    %v2616 = vunpack.c.l.b16 %v2546
    %v2617 = vunpack.c.l.b16 %v2547
    %v2618 = vunpack.c.l.b16 %v2548
    %v2619 = vunpack.c.l.b16 %v2549
    %v2620 = vunpack.c.l.b16 %v2550
    %v2621 = vunpack.c.l.b16 %v2551
    %v2622 = vunpack.c.l.b16 %v2552
    %v2623 = vunpack.c.l.b16 %v2553
    %v2624 = vunpack.c.l.b16 %v2554
    %v2625 = vunpack.c.l.b16 %v2555
    %v2626 = vunpack.c.l.b16 %v2556
    %v2627 = vunpack.c.l.b16 %v2557
    %v2628 = vunpack.c.l.b16 %v2558
    %v2629 = vunpack.c.l.b16 %v2559
    %v2630 = vunpack.c.l.b16 %v2560
    %v2631 = vunpack.c.l.b16 %v2561
    %v2632 = vunpack.c.l.b16 %v2562
    %v2633 = vunpack.c.l.b16 %v2563
    %v2634 = vunpack.c.l.b16 %v2564
    %v2635 = vunpack.c.l.b16 %v2565
    %v2636 = vunpack.c.l.b16 %v2566
    %v2637 = vunpack.c.l.b16 %v2567
    %v2638 = vunpack.c.l.b16 %v2568
    %v2639 = vunpack.c.l.b16 %v2569
    %v2640 = vunpack.c.l.b16 %v2570
    %v2641 = vunpack.c.l.b16 %v2571
    %v2642 = vunpack.c.l.b16 %v2572
    %v2643 = vunpack.c.l.b16 %v2573
    %v2644 = vunpack.c.l.b16 %v2574
    %v2645 = vunpack.c.l.b16 %v2575
    %v2646 = vunpack.c.l.b16 %v2576
    %v2647 = vunpack.c.l.b16 %v2577
    %v2648 = vpack.c.b16 %v2617, %v2616
    %v2649 = vpack.c.b16 %v2619, %v2618
    %v2650 = vpack.c.b16 %v2621, %v2620
    %v2651 = vpack.c.b16 %v2623, %v2622
    %v2652 = vpack.c.b16 %v2625, %v2624
    %v2653 = vpack.c.b16 %v2627, %v2626
    %v2654 = vpack.c.b16 %v2629, %v2628
    %v2655 = vpack.c.b16 %v2631, %v2630
    %v2656 = vpack.c.b16 %v2633, %v2632
    %v2657 = vpack.c.b16 %v2635, %v2634
    %v2658 = vpack.c.b16 %v2637, %v2636
    %v2659 = vpack.c.b16 %v2639, %v2638
    %v2660 = vpack.c.b16 %v2641, %v2640
    %v2661 = vpack.c.b16 %v2643, %v2642
    %v2662 = vpack.c.b16 %v2645, %v2644
    %v2663 = vpack.c.b16 %v2647, %v2646
    %2680 = vmatprep.subr.bf16.mxu0 0
    %2681 = vmatpush1.bf16.msra.mxu0 %v2648
    %2682 = vmatprep.subr.bf16.mxu0 0
    %2683 = vmatpush1.bf16.msra.mxu0 %v2649
    %2684 = vmatprep.subr.bf16.mxu0 0
    %2685 = vmatpush1.bf16.msra.mxu0 %v2650
    %2686 = vmatprep.subr.bf16.mxu0 0
    %2687 = vmatpush1.bf16.msra.mxu0 %v2651
    %2688 = vmatprep.subr.bf16.mxu0 0
    %2689 = vmatpush1.bf16.msra.mxu0 %v2652
    %2690 = vmatprep.subr.bf16.mxu0 0
    %2691 = vmatpush1.bf16.msra.mxu0 %v2653
    %2692 = vmatprep.subr.bf16.mxu0 0
    %2693 = vmatpush1.bf16.msra.mxu0 %v2654
    %2694 = vmatprep.subr.bf16.mxu0 0
    %2695 = vmatpush1.bf16.msra.mxu0 %v2655
    %2696 = vmatprep.subr.bf16.mxu0 0
    %2697 = vmatpush1.bf16.msra.mxu0 %v2656
    %2698 = vmatprep.subr.bf16.mxu0 0
    %2699 = vmatpush1.bf16.msra.mxu0 %v2657
    %2700 = vmatprep.subr.bf16.mxu0 0
    %2701 = vmatpush1.bf16.msra.mxu0 %v2658
    %2702 = vmatprep.subr.bf16.mxu0 0
    %2703 = vmatpush1.bf16.msra.mxu0 %v2659
    %2704 = vmatprep.subr.bf16.mxu0 0
    %2705 = vmatpush1.bf16.msra.mxu0 %v2660
    %2706 = vmatprep.subr.bf16.mxu0 0
    %2707 = vmatpush1.bf16.msra.mxu0 %v2661
    %2708 = vmatprep.subr.bf16.mxu0 0
    %2709 = vmatpush1.bf16.msra.mxu0 %v2662
    %2710 = vmatprep.subr.bf16.mxu0 0
    %2711 = vmatpush1.bf16.msra.mxu0 %v2663
    %2712 = vmatprep.mubr.bf16.mxu0 %v2545
    %2713 = vmatmul.mubr.bf16.gmra.mrb[0].mxu0 %v2544
    %v2714 = vpop.f32.mrb[0].mxu0
    %v2715 = vadd.f32 %v2582, %v2714
    %v2716 = vpop.f32.mrb[0].mxu0
    %v2717 = vpop.f32.mrb[0].mxu0
    %v2718 = vpop.f32.mrb[0].mxu0
    %2719 = vdwg.mxu0
    %2720 = vst [vmem:[#allocation8] sm:$0x3] %v2715
    // Predicated region
    $region38: #{tpu_custom_call.1} parent=1 // pred_check
      _
    $region39: #{tpu_custom_call.1} parent=1 // pred_check_branch
      %2722 = sbr.rel (0) target = $region41
    $region40: #{tpu_custom_call.1} parent=1 // pred_region
      %s2724 = ssub.s32 32, 32
      %2725 = vsyncadd [#allocation4], %s2724
      %s2727 = sshll.u32 [#allocation8], 4
      %s2728 = int_to_ptr.vmem [resolvable:$true] %s2727
      %2730 = dma.vmem_to_hbm [thread:$0]  %s2728, 32, %s6, [#allocation4]
    $region41: #{tpu_custom_call.1} parent=1 // pred_fallthru
      _
    // Predicated region
    $region42: #{tpu_custom_call.1} parent=1 // pred_check
      _
    $region43: #{tpu_custom_call.1} parent=1 // pred_check_branch
      %2732 = sbr.rel (0) target = $region45
    $region44: #{tpu_custom_call.1} parent=1 // pred_region
      %2733 = dma.done [#allocation4], 32
    $region45: #{tpu_custom_call.1} parent=1 // pred_fallthru
      _
    %2734 = vsyncpa [#allocation3], 1
    %2735 = vsyncpa [#allocation6], 1
    %2736 = vsyncpa [#allocation4], 1

</llo_original>
